<compile_context>
chip_gen: v6e
topology: v6e:2x2x1
jax: 0.10.0
libtpu: 0.0.40
codegen_flags: <defaults>
</compile_context>

<pallas_src>
import jax
import jax.numpy as jnp
import numpy as np
from jax.experimental import pallas as pl
from jax.experimental.pallas import tpu as pltpu

K1 = 5        # conv1 kernel size
STRIDE1 = 2   # conv1 stride
C1 = 20       # conv1 out channels
C2 = 2        # conv2 out channels
LN10 = 2.302585092994046  # ln(10)


def distance_model_kernel(x_ref, wbig_ref, b1_ref, w2big_ref, b2_ref, out_ref):
    # x_ref     : [2L, TB]  stacked [Rssi ; Ptx], batch on the lane axis
    # wbig_ref  : [R, 2L]   banded conv weights + 2 mean rows (+ zero pad rows)
    # b1_ref    : [R, 1]    conv bias replicated per output position (pad = 0)
    # w2big_ref : [8, R]    rows 0/1 = w2[o, c] / L1 at column c*L1+t, else 0
    # b2_ref    : [2]       SMEM scalars (61.0, 2.8)
    # out_ref   : [1, TB]
    two_l = x_ref.shape[0]
    L = two_l // 2
    L1 = (L - K1) // STRIDE1 + 1          # conv1 output length (static)
    CL1 = C1 * L1                         # number of conv rows (static)

    x = x_ref[...]                        # [2L, TB]

    # --- One MXU matmul: all conv pre-activations + both channel means ------
    m = jnp.dot(wbig_ref[...], x,
                preferred_element_type=jnp.float32,
                precision=jax.lax.Precision.HIGHEST)          # [R, TB]
    rssi_mean = m[CL1:CL1 + 1, :]                             # [1, TB]
    ptx_mean = m[CL1 + 1:CL1 + 2, :]                          # [1, TB]

    # --- Bias + ReLU on the conv rows ----------------------------------------
    # (mean / pad rows become junk here but are multiplied by zero columns of
    #  w2big below, so they never contribute.)
    a = jnp.maximum(m + b1_ref[...], 0.0)                     # [R, TB]

    # --- Second small MXU matmul: 1x1 conv folded with the average pool -----
    # pn[o, b] = sum_{c,t} (w2[o,c]/L1) * ReLU(conv[c,t,b])
    pn = jnp.dot(w2big_ref[...], a,
                 preferred_element_type=jnp.float32,
                 precision=jax.lax.Precision.HIGHEST)         # [8, TB]
    P0 = pn[0:1, :] + b2_ref[0]                               # [1, TB]
    n = pn[1:2, :] + b2_ref[1]                                # [1, TB]

    # --- distance(Ptx_mean, Rssi_mean, P0, n) = 10**((Ptx-Rssi-P0)/(10*n)) ---
    expo = (ptx_mean - rssi_mean - P0) / (10.0 * n)
    out_ref[...] = jnp.exp(LN10 * expo)                       # lane-dense store


def _round_up(a, m):
    return (a + m - 1) // m * m


def _pick_tile(B):
    """Lane tile: big enough to amortize per-step overhead, but >=2 grid steps
    when possible so both v7x TensorCores are used (no-op on v5e/v6e)."""
    b128 = _round_up(B, 128)
    tb = min(8192, b128)
    if b128 >= 256:
        tb = min(tb, _round_up(-(-b128 // 2), 128))
    return tb


def distance_model_forward(x, w1, b1, w2, b2, *, tb=None):
    """x: [B, 2, L] f32; w1: [20,5]; b1: [20]; w2: [2,20]; b2: [2] -> d: [B]."""
    B, ch, L = x.shape
    assert ch == 2 and L >= K1, "need 2 channels and L >= conv kernel size"
    L1 = (L - K1) // STRIDE1 + 1
    CL1 = C1 * L1
    R = _round_up(CL1 + 2, 8)              # conv rows + 2 mean rows, 8-aligned

    if tb is None:
        tb = _pick_tile(B)
    B_pad = _round_up(_round_up(B, 128), tb)

    # ---- Layout plumbing in the wrapper (free relative to the kernel) ------
    # Stack channels so X[c*L + l, b] = x[b, c, l]; batch rides the lane axis.
    X = jnp.transpose(x.reshape(B, 2 * L)).astype(jnp.float32)      # [2L, B]
    if B_pad != B:
        X = jnp.pad(X, ((0, 0), (0, B_pad - B)))

    # Banded weight matrix (exact construction: one-hot placement, no matmul).
    place = np.zeros((L1, K1, 2 * L), np.float32)
    for t in range(L1):
        for k in range(K1):
            place[t, k, STRIDE1 * t + k] = 1.0
    w1f = w1.reshape(C1, K1).astype(jnp.float32)
    wconv = (w1f[:, None, :, None] * jnp.asarray(place)[None, :, :, :]
             ).sum(axis=2).reshape(CL1, 2 * L)                      # [CL1, 2L]
    extra = np.zeros((R - CL1, 2 * L), np.float32)
    extra[0, 0:L] = 1.0 / L            # row CL1:   Rssi mean
    extra[1, L:2 * L] = 1.0 / L        # row CL1+1: Ptx mean
    wbig = jnp.concatenate([wconv, jnp.asarray(extra)], axis=0)     # [R, 2L]

    b1rows = jnp.concatenate([
        jnp.repeat(b1.reshape(C1).astype(jnp.float32), L1),
        jnp.zeros((R - CL1,), jnp.float32)]).reshape(R, 1)          # [R, 1]

    w2rows = jnp.repeat(w2.reshape(C2, C1).astype(jnp.float32), L1,
                        axis=1) / float(L1)                         # [2, CL1]
    w2big = jnp.zeros((8, R), jnp.float32).at[0:C2, 0:CL1].set(w2rows)

    b2s = b2.reshape(C2).astype(jnp.float32)                        # SMEM

    grid = (B_pad // tb,)
    out = pl.pallas_call(
        distance_model_kernel,
        out_shape=jax.ShapeDtypeStruct((1, B_pad), jnp.float32),
        grid_spec=pltpu.PrefetchScalarGridSpec(
            num_scalar_prefetch=0,
            grid=grid,
            in_specs=[
                pl.BlockSpec((2 * L, tb), lambda i: (0, i)),    # stacked input
                pl.BlockSpec((R, 2 * L), lambda i: (0, 0)),     # W_big (resident)
                pl.BlockSpec((R, 1), lambda i: (0, 0)),         # b1 rows
                pl.BlockSpec((8, R), lambda i: (0, 0)),         # w2 / L1 rows
                pl.BlockSpec(memory_space=pltpu.MemorySpace.SMEM),  # b2 scalars
            ],
            out_specs=pl.BlockSpec((1, tb), lambda i: (0, i)),
        ),
        compiler_params=pltpu.CompilerParams(
            dimension_semantics=("parallel",),     # shard batch tiles over TCs
            vmem_limit_bytes=32 * 1024 * 1024,     # ~12 MiB used at tb=8192
        ),
    )(X, wbig, b1rows, w2big, b2s)
    return out[0, :B]                              # [B], matches PyTorch d


def reference_forward(x, w1, b1, w2, b2):
    """Pure-JAX reference mirroring the PyTorch semantics."""
    x0 = x[:, 0:1, :]                                # [B, 1, L]
    h = jax.lax.conv_general_dilated(
        x0, w1[:, None, :], window_strides=(STRIDE1,), padding="VALID",
        dimension_numbers=("NCH", "OIH", "NCH"),
        precision=jax.lax.Precision.HIGHEST)         # [B, 20, L1]
    h = jnp.maximum(h + b1.reshape(1, C1, 1), 0.0)
    y = jnp.einsum("bcl,oc->bol", h, w2,
                   precision=jax.lax.Precision.HIGHEST) + b2.reshape(1, C2, 1)
    inter = jnp.mean(y, axis=-1)                     # [B, 2]
    P0 = inter[:, 0]
    n = inter[:, 1]
    Ptx = x[:, 1, :].mean(axis=1)
    Rssi = x[:, 0, :].mean(axis=1)
    return 10.0 ** ((Ptx - Rssi - P0) / (10.0 * n))


if __name__ == "__main__":
    key = jax.random.PRNGKey(0)
    k_x, k_w1, k_b1, k_w2 = jax.random.split(key, 4)

    B, L = 2, 16
    x = jax.random.normal(k_x, (B, 2, L), dtype=jnp.float32)

    # Deterministic parameter init (PyTorch-style uniform bounds).
    bound1 = 1.0 / np.sqrt(1 * K1)
    w1 = jax.random.uniform(k_w1, (C1, K1), jnp.float32, -bound1, bound1)
    b1 = jax.random.uniform(k_b1, (C1,), jnp.float32, -bound1, bound1)
    bound2 = 1.0 / np.sqrt(C1 * 1)
    w2 = jax.random.uniform(k_w2, (C2, C1), jnp.float32, -bound2, bound2)
    b2 = jnp.array([61.0, 2.8], dtype=jnp.float32)   # layer2.bias override

    d = distance_model_forward(x, w1, b1, w2, b2)
    d = jax.block_until_ready(d)

    d_ref = reference_forward(x, w1, b1, w2, b2)
    assert d.shape == (B,)
    np.testing.assert_allclose(np.asarray(d), np.asarray(d_ref),
                               rtol=1e-4, atol=1e-6)
    print("KERNEL_OK")
</pallas_src>

<mosaic_0001>
module attributes {stable_mosaic.version = 11 : i64} {
  func.func @distance_model_kernel(%arg0: i32, %arg1: memref<32x128xf32, #tpu.memory_space<vmem>>, %arg2: memref<128x32xf32, #tpu.memory_space<vmem>>, %arg3: memref<128x1xf32, #tpu.memory_space<vmem>>, %arg4: memref<8x128xf32, #tpu.memory_space<vmem>>, %arg5: memref<2xf32, #tpu.memory_space<smem>>, %arg6: memref<1x128xf32, #tpu.memory_space<vmem>>) attributes {dimension_semantics = [#tpu.dimension_semantics<parallel>], iteration_bounds = array<i64: 1>, scalar_prefetch = 0 : i64, scratch_operands = 0 : i64, tpu.core_type = #tpu.core_type<tc>, window_params = [{transform_indices = @transform_0, window_bounds = array<i64: 32, 128>}, {pipeline_mode = #tpu.pipeline_mode<synchronous>, transform_indices = @transform_1, window_bounds = array<i64: 128, 32>}, {pipeline_mode = #tpu.pipeline_mode<synchronous>, transform_indices = @transform_2, window_bounds = array<i64: 128, 1>}, {pipeline_mode = #tpu.pipeline_mode<synchronous>, transform_indices = @transform_3, window_bounds = array<i64: 8, 128>}, {transform_indices = @transform_4, window_bounds = array<i64: 2>}, {transform_indices = @transform_5, window_bounds = array<i64: 1, 128>}]} {
    %c0 = arith.constant 0 : index
    %c0_0 = arith.constant 0 : index
    %0 = vector.load %arg1[%c0, %c0_0] : memref<32x128xf32, #tpu.memory_space<vmem>>, vector<32x128xf32>
    %c0_1 = arith.constant 0 : index
    %c0_2 = arith.constant 0 : index
    %1 = vector.load %arg2[%c0_1, %c0_2] : memref<128x32xf32, #tpu.memory_space<vmem>>, vector<128x32xf32>
    %cst = arith.constant dense<0.000000e+00> : vector<128x128xf32>
    %2 = tpu.matmul %1, %0, %cst {dimension_numbers = #tpu.dot_dimension_numbers<[1], [0], [0], [1], [0, 0, 1, 1], [], []>, precision = #tpu.contract_precision<fp32>} : vector<128x32xf32>, vector<32x128xf32>, vector<128x128xf32> -> vector<128x128xf32>
    %3 = vector.extract_strided_slice %2 {offsets = [120, 0], sizes = [1, 128], strides = [1, 1]} : vector<128x128xf32> to vector<1x128xf32>
    %4 = vector.extract_strided_slice %2 {offsets = [121, 0], sizes = [1, 128], strides = [1, 1]} : vector<128x128xf32> to vector<1x128xf32>
    %c0_3 = arith.constant 0 : index
    %c0_4 = arith.constant 0 : index
    %5 = vector.load %arg3[%c0_3, %c0_4] : memref<128x1xf32, #tpu.memory_space<vmem>>, vector<128x1xf32>
    %6 = vector.broadcast %5 : vector<128x1xf32> to vector<128x128xf32>
    %7 = arith.addf %2, %6 : vector<128x128xf32>
    %cst_5 = arith.constant 0.000000e+00 : f32
    %8 = vector.broadcast %cst_5 : f32 to vector<128x128xf32>
    %9 = arith.maximumf %7, %8 : vector<128x128xf32>
    %c0_6 = arith.constant 0 : index
    %c0_7 = arith.constant 0 : index
    %10 = vector.load %arg4[%c0_6, %c0_7] : memref<8x128xf32, #tpu.memory_space<vmem>>, vector<8x128xf32>
    %cst_8 = arith.constant dense<0.000000e+00> : vector<8x128xf32>
    %11 = tpu.matmul %10, %9, %cst_8 {dimension_numbers = #tpu.dot_dimension_numbers<[1], [0], [0], [1], [0, 0, 1, 1], [], []>, precision = #tpu.contract_precision<fp32>} : vector<8x128xf32>, vector<128x128xf32>, vector<8x128xf32> -> vector<8x128xf32>
    %12 = vector.extract_strided_slice %11 {offsets = [0, 0], sizes = [1, 128], strides = [1, 1]} : vector<8x128xf32> to vector<1x128xf32>
    %c0_9 = arith.constant 0 : index
    %13 = memref.load %arg5[%c0_9] : memref<2xf32, #tpu.memory_space<smem>>
    %14 = vector.broadcast %13 : f32 to vector<1x128xf32>
    %15 = arith.addf %12, %14 : vector<1x128xf32>
    %16 = vector.extract_strided_slice %11 {offsets = [1, 0], sizes = [1, 128], strides = [1, 1]} : vector<8x128xf32> to vector<1x128xf32>
    %c1 = arith.constant 1 : index
    %17 = memref.load %arg5[%c1] : memref<2xf32, #tpu.memory_space<smem>>
    %18 = vector.broadcast %17 : f32 to vector<1x128xf32>
    %19 = arith.addf %16, %18 : vector<1x128xf32>
    %20 = arith.subf %4, %3 : vector<1x128xf32>
    %21 = arith.subf %20, %15 : vector<1x128xf32>
    %cst_10 = arith.constant 1.000000e+01 : f32
    %22 = vector.broadcast %cst_10 : f32 to vector<1x128xf32>
    %23 = arith.mulf %22, %19 : vector<1x128xf32>
    %24 = arith.divf %21, %23 : vector<1x128xf32>
    %cst_11 = arith.constant 2.30258512 : f32
    %25 = vector.broadcast %cst_11 : f32 to vector<1x128xf32>
    %26 = arith.mulf %25, %24 : vector<1x128xf32>
    %27 = math.exp %26 : vector<1x128xf32>
    %c0_12 = arith.constant 0 : index
    %c0_13 = arith.constant 0 : index
    %28 = vector.load %arg6[%c0_12, %c0_13] : memref<1x128xf32, #tpu.memory_space<vmem>>, vector<1x128xf32>
    tpu.vector_store %arg6[%c0_12, %c0_13], %27 {strides = array<i32>} : memref<1x128xf32, #tpu.memory_space<vmem>>, vector<1x128xf32>,
    return
  }
  func.func @transform_0(%arg0: i32) -> (i32, i32) {
    %c0_i32 = arith.constant 0 : i32
    %c0_i32_0 = arith.constant 0 : i32
    return %c0_i32, %arg0 : i32, i32
  }
  func.func @transform_1(%arg0: i32) -> (i32, i32) {
    %c0_i32 = arith.constant 0 : i32
    %c0_i32_0 = arith.constant 0 : i32
    %c0_i32_1 = arith.constant 0 : i32
    return %c0_i32, %c0_i32_0 : i32, i32
  }
  func.func @transform_2(%arg0: i32) -> (i32, i32) {
    %c0_i32 = arith.constant 0 : i32
    %c0_i32_0 = arith.constant 0 : i32
    %c0_i32_1 = arith.constant 0 : i32
    return %c0_i32, %c0_i32_0 : i32, i32
  }
  func.func @transform_3(%arg0: i32) -> (i32, i32) {
    %c0_i32 = arith.constant 0 : i32
    %c0_i32_0 = arith.constant 0 : i32
    %c0_i32_1 = arith.constant 0 : i32
    return %c0_i32, %c0_i32_0 : i32, i32
  }
  func.func @transform_4(%arg0: i32) -> i32 {
    %c0_i32 = arith.constant 0 : i32
    %c0_i32_0 = arith.constant 0 : i32
    return %c0_i32 : i32
  }
  func.func @transform_5(%arg0: i32) -> (i32, i32) {
    %c0_i32 = arith.constant 0 : i32
    %c0_i32_0 = arith.constant 0 : i32
    return %c0_i32, %arg0 : i32, i32
  }
}

</mosaic_0001>

<llo_original>
// kernel: tpu_custom_call.1
$region0: #{tpu_custom_call.1}
  #allocation0 [shape = 'u32[]', space=smem, size = 0x4, offset = 0x4, fixed_abs, tag = 'smem constant byte address 0x4 - core index']
  #allocation1 [shape = 'u32[144,128]{1,0:T(1,128)}', space=vmem, size = 0x12000, scoped, tag = 'internal scratch']
  %s0 = inlined_call_operand.vmem [shape: f32[32,128], index: 0, kind: input, shape index: {}]
  %s1 = inlined_call_operand.vmem [shape: f32[128,32], index: 1, kind: input, shape index: {}]
  %s2 = inlined_call_operand.vmem [shape: f32[128,1], index: 2, kind: input, shape index: {}]
  %s3 = inlined_call_operand.vmem [shape: f32[8,128], index: 3, kind: input, shape index: {}]
  %s4 = inlined_call_operand.vmem [shape: f32[2], index: 4, kind: input, shape index: {}]
  %s5 = inlined_call_operand.hbm [shape: f32[1,128], index: 5, kind: output, shape index: {}]
  %s6 = sld [smem:[#allocation0]]
  $region34: #{tpu_custom_call.1} parent=0
    _
  %s8 = ssub.s32 1, %s6
  %s9 = scalar_select 0, %s8, %s6
  $region1: #{tpu_custom_call.1} parent=0
    #allocation2 [shape = 'u8[512]{0}', space=smem, size = 0x200, scoped, tag = 'input window, operand 4, single buffered']
    #allocation3 [shape = 's32[1]{0}', space=sflag, size = 0x4, scoped, tag = 'scoped memory for tpu_custom_call.1']
    #allocation4 [shape = 's32[1]{0}', space=sflag, size = 0x4, scoped, tag = 'scoped memory for tpu_custom_call.1']
    #allocation5 [shape = 'u8[512]{0}', space=vmem, size = 0x400, scoped, tag = 'output window, operand 0, single buffered']
    %10 = vsyncpa [#allocation4], 0
    %11 = vsyncpa [#allocation3], 0
    // Predicated region
    $region2: #{tpu_custom_call.1} parent=1 // pred_check
      _
    $region3: #{tpu_custom_call.1} parent=1 // pred_check_branch
      %13 = sbr.rel (0) target = $region5
    $region4: #{tpu_custom_call.1} parent=1 // pred_region
      _
    $region5: #{tpu_custom_call.1} parent=1 // pred_fallthru
      _
    // Predicated region
    $region6: #{tpu_custom_call.1} parent=1 // pred_check
      _
    $region7: #{tpu_custom_call.1} parent=1 // pred_check_branch
      %15 = sbr.rel (0) target = $region9
    $region8: #{tpu_custom_call.1} parent=1 // pred_region
      _
    $region9: #{tpu_custom_call.1} parent=1 // pred_fallthru
      _
    // Predicated region
    $region10: #{tpu_custom_call.1} parent=1 // pred_check
      _
    $region11: #{tpu_custom_call.1} parent=1 // pred_check_branch
      %17 = sbr.rel (0) target = $region13
    $region12: #{tpu_custom_call.1} parent=1 // pred_region
      _
    $region13: #{tpu_custom_call.1} parent=1 // pred_fallthru
      _
    // Predicated region
    $region14: #{tpu_custom_call.1} parent=1 // pred_check
      _
    $region15: #{tpu_custom_call.1} parent=1 // pred_check_branch
      %19 = sbr.rel (0) target = $region17
    $region16: #{tpu_custom_call.1} parent=1 // pred_region
      _
    $region17: #{tpu_custom_call.1} parent=1 // pred_fallthru
      _
    // Predicated region
    $region18: #{tpu_custom_call.1} parent=1 // pred_check
      _
    $region19: #{tpu_custom_call.1} parent=1 // pred_check_branch
      %21 = sbr.rel (0) target = $region21
    $region20: #{tpu_custom_call.1} parent=1 // pred_region
      %s23 = ssub.s32 16, 16
      %24 = vsyncadd [#allocation4], %s23
      %s26 = sshll.u32 %s4, 4
      %s27 = int_to_ptr.vmem [resolvable:$true] %s26
      %29 = dma.vmem_to_smem %s27, 16, [#allocation2], [#allocation4]
    $region21: #{tpu_custom_call.1} parent=1 // pred_fallthru
      _
    // Predicated region
    $region22: #{tpu_custom_call.1} parent=1 // pred_check
      _
    $region23: #{tpu_custom_call.1} parent=1 // pred_check_branch
      %31 = sbr.rel (0) target = $region25
    $region24: #{tpu_custom_call.1} parent=1 // pred_region
      %32 = dma.done [#allocation4], 16
    $region25: #{tpu_custom_call.1} parent=1 // pred_fallthru
      _
    %33 = sfence
    %v34 = vld [vmem:[%s0] sm:$0xff]
    %v35 = vld [vmem:[%s0 + $0x8] sm:$0xff]
    %v36 = vld [vmem:[%s0 + $0x10] sm:$0xff]
    %v37 = vld [vmem:[%s0 + $0x18] sm:$0xff]
    %v38 = vld [vmem:[%s1] sm:$0xff]
    %v39 = vld [vmem:[%s1 + $0x8] sm:$0xff]
    %v40 = vld [vmem:[%s1 + $0x10] sm:$0xff]
    %v41 = vld [vmem:[%s1 + $0x18] sm:$0xff]
    %v42 = vld [vmem:[%s1 + $0x20] sm:$0xff]
    %v43 = vld [vmem:[%s1 + $0x28] sm:$0xff]
    %v44 = vld [vmem:[%s1 + $0x30] sm:$0xff]
    %v45 = vld [vmem:[%s1 + $0x38] sm:$0xff]
    %v46 = vld [vmem:[%s1 + $0x40] sm:$0xff]
    %v47 = vld [vmem:[%s1 + $0x48] sm:$0xff]
    %v48 = vld [vmem:[%s1 + $0x50] sm:$0xff]
    %v49 = vld [vmem:[%s1 + $0x58] sm:$0xff]
    %v50 = vld [vmem:[%s1 + $0x60] sm:$0xff]
    %v51 = vld [vmem:[%s1 + $0x68] sm:$0xff]
    %v52 = vld [vmem:[%s1 + $0x70] sm:$0xff]
    %v53 = vld [vmem:[%s1 + $0x78] sm:$0xff]
    %vm54 = vcmask 261120
    %v56 = vsel %vm54, %v38, 0
    %v59 = vsel %vm54, %v39, 0
    %v62 = vsel %vm54, %v40, 0
    %v65 = vsel %vm54, %v41, 0
    %v68 = vsel %vm54, %v42, 0
    %v71 = vsel %vm54, %v43, 0
    %v74 = vsel %vm54, %v44, 0
    %v77 = vsel %vm54, %v45, 0
    %v80 = vsel %vm54, %v46, 0
    %v83 = vsel %vm54, %v47, 0
    %v86 = vsel %vm54, %v48, 0
    %v89 = vsel %vm54, %v49, 0
    %v92 = vsel %vm54, %v50, 0
    %v95 = vsel %vm54, %v51, 0
    %v98 = vsel %vm54, %v52, 0
    %v101 = vsel %vm54, %v53, 0
    %103 = vmatprep.subr.mxu0 0.0
    %104 = vmatpush1.msra.mxu0 0.0
    %105 = vmatprep.subr.mxu0 0.0
    %106 = vmatpush1.msra.mxu0 0.0
    %107 = vmatprep.subr.mxu0 0.0
    %108 = vmatpush1.msra.mxu0 0.0
    %109 = vmatprep.subr.mxu0 0.0
    %110 = vmatpush1.msra.mxu0 0.0
    %111 = vmatprep.subr.mxu0 0.0
    %112 = vmatpush1.msra.mxu0 0.0
    %113 = vmatprep.subr.mxu0 0.0
    %114 = vmatpush1.msra.mxu0 0.0
    %115 = vmatprep.subr.mxu0 0.0
    %116 = vmatpush1.msra.mxu0 0.0
    %117 = vmatprep.subr.mxu0 0.0
    %118 = vmatpush1.msra.mxu0 0.0
    %119 = vmatprep.subr.mxu0 0.0
    %120 = vmatpush1.msra.mxu0 0.0
    %121 = vmatprep.subr.mxu0 0.0
    %122 = vmatpush1.msra.mxu0 0.0
    %123 = vmatprep.subr.mxu0 0.0
    %124 = vmatpush1.msra.mxu0 0.0
    %125 = vmatprep.subr.mxu0 0.0
    %126 = vmatpush1.msra.mxu0 0.0
    %127 = vmatprep.subr.mxu0 0.0
    %v128 = vand.u32 %v37, 4294901760
    %129 = vmatpush1.msra.mxu0 %v128
    %130 = vmatprep.subr.mxu0 0.0
    %v131 = vand.u32 %v36, 4294901760
    %132 = vmatpush1.msra.mxu0 %v131
    %133 = vmatprep.subr.mxu0 0.0
    %v134 = vand.u32 %v35, 4294901760
    %135 = vmatpush1.msra.mxu0 %v134
    %136 = vmatprep.subr.mxu0 0.0
    %v137 = vand.u32 %v34, 4294901760
    %138 = vmatpush1.msra.mxu0 %v137
    %139 = vmatprep.subr.mxu0 0.0
    %140 = vmatpush2.msra.mxu0 0.0
    %141 = vmatprep.subr.mxu0 0.0
    %142 = vmatpush2.msra.mxu0 0.0
    %143 = vmatprep.subr.mxu0 0.0
    %144 = vmatpush2.msra.mxu0 0.0
    %145 = vmatprep.subr.mxu0 0.0
    %146 = vmatpush2.msra.mxu0 0.0
    %147 = vmatprep.subr.mxu0 0.0
    %148 = vmatpush2.msra.mxu0 0.0
    %149 = vmatprep.subr.mxu0 0.0
    %150 = vmatpush2.msra.mxu0 0.0
    %151 = vmatprep.subr.mxu0 0.0
    %152 = vmatpush2.msra.mxu0 0.0
    %153 = vmatprep.subr.mxu0 0.0
    %154 = vmatpush2.msra.mxu0 0.0
    %155 = vmatprep.subr.mxu0 0.0
    %156 = vmatpush2.msra.mxu0 0.0
    %157 = vmatprep.subr.mxu0 0.0
    %158 = vmatpush2.msra.mxu0 0.0
    %159 = vmatprep.subr.mxu0 0.0
    %160 = vmatpush2.msra.mxu0 0.0
    %161 = vmatprep.subr.mxu0 0.0
    %162 = vmatpush2.msra.mxu0 0.0
    %163 = vmatprep.subr.mxu0 0.0
    %164 = vmatpush2.msra.mxu0 0.0
    %165 = vmatprep.subr.mxu0 0.0
    %166 = vmatpush2.msra.mxu0 0.0
    %167 = vmatprep.subr.mxu0 0.0
    %168 = vmatpush2.msra.mxu0 0.0
    %169 = vmatprep.subr.mxu0 0.0
    %170 = vmatpush2.msra.mxu0 0.0
    %171 = vmatprep.mubr.f32.mxu0 0.0
    %v172 = vand.u32 %v56, 4294901760
    %v173 = vsub.f32 %v56, %v172
    %v174 = vand.u32 %v173, 4294901760
    %v175 = vsub.f32 %v173, %v174
    %v176 = vand.u32 %v175, 4294901760
    %177 = vmatmul.mubr.f32.gmra.mxu0 %v176
    %v178 = vpop.f32.mrf.mxu0
    %v179 = vadd.f32 0.0, %v178
    %v180 = vpop.f32.mrf.mxu0
    %181 = vmatprep.mubr.f32.mxu0 0.0
    %v182 = vand.u32 %v59, 4294901760
    %v183 = vsub.f32 %v59, %v182
    %v184 = vand.u32 %v183, 4294901760
    %v185 = vsub.f32 %v183, %v184
    %v186 = vand.u32 %v185, 4294901760
    %187 = vmatmul.mubr.f32.gmra.mxu0 %v186
    %v188 = vpop.f32.mrf.mxu0
    %v189 = vadd.f32 0.0, %v188
    %v190 = vpop.f32.mrf.mxu0
    %191 = vmatprep.mubr.f32.mxu0 0.0
    %v192 = vand.u32 %v62, 4294901760
    %v193 = vsub.f32 %v62, %v192
    %v194 = vand.u32 %v193, 4294901760
    %v195 = vsub.f32 %v193, %v194
    %v196 = vand.u32 %v195, 4294901760
    %197 = vmatmul.mubr.f32.gmra.mxu0 %v196
    %v198 = vpop.f32.mrf.mxu0
    %v199 = vadd.f32 0.0, %v198
    %v200 = vpop.f32.mrf.mxu0
    %201 = vmatprep.mubr.f32.mxu0 0.0
    %v202 = vand.u32 %v65, 4294901760
    %v203 = vsub.f32 %v65, %v202
    %v204 = vand.u32 %v203, 4294901760
    %v205 = vsub.f32 %v203, %v204
    %v206 = vand.u32 %v205, 4294901760
    %207 = vmatmul.mubr.f32.gmra.mxu0 %v206
    %v208 = vpop.f32.mrf.mxu0
    %v209 = vadd.f32 0.0, %v208
    %v210 = vpop.f32.mrf.mxu0
    %211 = vmatprep.mubr.f32.mxu0 0.0
    %v212 = vand.u32 %v68, 4294901760
    %v213 = vsub.f32 %v68, %v212
    %v214 = vand.u32 %v213, 4294901760
    %v215 = vsub.f32 %v213, %v214
    %v216 = vand.u32 %v215, 4294901760
    %217 = vmatmul.mubr.f32.gmra.mxu0 %v216
    %v218 = vpop.f32.mrf.mxu0
    %v219 = vadd.f32 0.0, %v218
    %v220 = vpop.f32.mrf.mxu0
    %221 = vmatprep.mubr.f32.mxu0 0.0
    %v222 = vand.u32 %v71, 4294901760
    %v223 = vsub.f32 %v71, %v222
    %v224 = vand.u32 %v223, 4294901760
    %v225 = vsub.f32 %v223, %v224
    %v226 = vand.u32 %v225, 4294901760
    %227 = vmatmul.mubr.f32.gmra.mxu0 %v226
    %v228 = vpop.f32.mrf.mxu0
    %v229 = vadd.f32 0.0, %v228
    %v230 = vpop.f32.mrf.mxu0
    %231 = vmatprep.mubr.f32.mxu0 0.0
    %v232 = vand.u32 %v74, 4294901760
    %v233 = vsub.f32 %v74, %v232
    %v234 = vand.u32 %v233, 4294901760
    %v235 = vsub.f32 %v233, %v234
    %v236 = vand.u32 %v235, 4294901760
    %237 = vmatmul.mubr.f32.gmra.mxu0 %v236
    %v238 = vpop.f32.mrf.mxu0
    %v239 = vadd.f32 0.0, %v238
    %v240 = vpop.f32.mrf.mxu0
    %241 = vmatprep.mubr.f32.mxu0 0.0
    %v242 = vand.u32 %v77, 4294901760
    %v243 = vsub.f32 %v77, %v242
    %v244 = vand.u32 %v243, 4294901760
    %v245 = vsub.f32 %v243, %v244
    %v246 = vand.u32 %v245, 4294901760
    %247 = vmatmul.mubr.f32.gmra.mxu0 %v246
    %v248 = vpop.f32.mrf.mxu0
    %v249 = vadd.f32 0.0, %v248
    %v250 = vpop.f32.mrf.mxu0
    %251 = vmatprep.mubr.f32.mxu0 0.0
    %v252 = vand.u32 %v80, 4294901760
    %v253 = vsub.f32 %v80, %v252
    %v254 = vand.u32 %v253, 4294901760
    %v255 = vsub.f32 %v253, %v254
    %v256 = vand.u32 %v255, 4294901760
    %257 = vmatmul.mubr.f32.gmra.mxu0 %v256
    %v258 = vpop.f32.mrf.mxu0
    %v259 = vadd.f32 0.0, %v258
    %v260 = vpop.f32.mrf.mxu0
    %261 = vmatprep.mubr.f32.mxu0 0.0
    %v262 = vand.u32 %v83, 4294901760
    %v263 = vsub.f32 %v83, %v262
    %v264 = vand.u32 %v263, 4294901760
    %v265 = vsub.f32 %v263, %v264
    %v266 = vand.u32 %v265, 4294901760
    %267 = vmatmul.mubr.f32.gmra.mxu0 %v266
    %v268 = vpop.f32.mrf.mxu0
    %v269 = vadd.f32 0.0, %v268
    %v270 = vpop.f32.mrf.mxu0
    %271 = vmatprep.mubr.f32.mxu0 0.0
    %v272 = vand.u32 %v86, 4294901760
    %v273 = vsub.f32 %v86, %v272
    %v274 = vand.u32 %v273, 4294901760
    %v275 = vsub.f32 %v273, %v274
    %v276 = vand.u32 %v275, 4294901760
    %277 = vmatmul.mubr.f32.gmra.mxu0 %v276
    %v278 = vpop.f32.mrf.mxu0
    %v279 = vadd.f32 0.0, %v278
    %v280 = vpop.f32.mrf.mxu0
    %281 = vmatprep.mubr.f32.mxu0 0.0
    %v282 = vand.u32 %v89, 4294901760
    %v283 = vsub.f32 %v89, %v282
    %v284 = vand.u32 %v283, 4294901760
    %v285 = vsub.f32 %v283, %v284
    %v286 = vand.u32 %v285, 4294901760
    %287 = vmatmul.mubr.f32.gmra.mxu0 %v286
    %v288 = vpop.f32.mrf.mxu0
    %v289 = vadd.f32 0.0, %v288
    %v290 = vpop.f32.mrf.mxu0
    %291 = vmatprep.mubr.f32.mxu0 0.0
    %v292 = vand.u32 %v92, 4294901760
    %v293 = vsub.f32 %v92, %v292
    %v294 = vand.u32 %v293, 4294901760
    %v295 = vsub.f32 %v293, %v294
    %v296 = vand.u32 %v295, 4294901760
    %297 = vmatmul.mubr.f32.gmra.mxu0 %v296
    %v298 = vpop.f32.mrf.mxu0
    %v299 = vadd.f32 0.0, %v298
    %v300 = vpop.f32.mrf.mxu0
    %301 = vmatprep.mubr.f32.mxu0 0.0
    %v302 = vand.u32 %v95, 4294901760
    %v303 = vsub.f32 %v95, %v302
    %v304 = vand.u32 %v303, 4294901760
    %v305 = vsub.f32 %v303, %v304
    %v306 = vand.u32 %v305, 4294901760
    %307 = vmatmul.mubr.f32.gmra.mxu0 %v306
    %v308 = vpop.f32.mrf.mxu0
    %v309 = vadd.f32 0.0, %v308
    %v310 = vpop.f32.mrf.mxu0
    %311 = vmatprep.mubr.f32.mxu0 0.0
    %v312 = vand.u32 %v98, 4294901760
    %v313 = vsub.f32 %v98, %v312
    %v314 = vand.u32 %v313, 4294901760
    %v315 = vsub.f32 %v313, %v314
    %v316 = vand.u32 %v315, 4294901760
    %317 = vmatmul.mubr.f32.gmra.mxu0 %v316
    %v318 = vpop.f32.mrf.mxu0
    %v319 = vadd.f32 0.0, %v318
    %v320 = vpop.f32.mrf.mxu0
    %321 = vmatprep.mubr.f32.mxu0 0.0
    %v322 = vand.u32 %v101, 4294901760
    %v323 = vsub.f32 %v101, %v322
    %v324 = vand.u32 %v323, 4294901760
    %v325 = vsub.f32 %v323, %v324
    %v326 = vand.u32 %v325, 4294901760
    %327 = vmatmul.mubr.f32.gmra.mxu0 %v326
    %v328 = vpop.f32.mrf.mxu0
    %v329 = vadd.f32 0.0, %v328
    %v330 = vpop.f32.mrf.mxu0
    %331 = vdwg.mxu0
    %332 = vmatprep.subr.mxu0 0.0
    %333 = vmatpush1.msra.mxu0 0.0
    %334 = vmatprep.subr.mxu0 0.0
    %335 = vmatpush1.msra.mxu0 0.0
    %336 = vmatprep.subr.mxu0 0.0
    %337 = vmatpush1.msra.mxu0 0.0
    %338 = vmatprep.subr.mxu0 0.0
    %339 = vmatpush1.msra.mxu0 0.0
    %340 = vmatprep.subr.mxu0 0.0
    %341 = vmatpush1.msra.mxu0 0.0
    %342 = vmatprep.subr.mxu0 0.0
    %343 = vmatpush1.msra.mxu0 0.0
    %344 = vmatprep.subr.mxu0 0.0
    %345 = vmatpush1.msra.mxu0 0.0
    %346 = vmatprep.subr.mxu0 0.0
    %347 = vmatpush1.msra.mxu0 0.0
    %348 = vmatprep.subr.mxu0 0.0
    %349 = vmatpush1.msra.mxu0 0.0
    %350 = vmatprep.subr.mxu0 0.0
    %351 = vmatpush1.msra.mxu0 0.0
    %352 = vmatprep.subr.mxu0 0.0
    %353 = vmatpush1.msra.mxu0 0.0
    %354 = vmatprep.subr.mxu0 0.0
    %355 = vmatpush1.msra.mxu0 0.0
    %356 = vmatprep.subr.mxu0 0.0
    %v357 = vand.u32 %v37, 4294901760
    %v358 = vsub.f32 %v37, %v357
    %v359 = vand.u32 %v358, 4294901760
    %v360 = vsub.f32 %v358, %v359
    %v361 = vand.u32 %v360, 4294901760
    %362 = vmatpush1.msra.mxu0 %v361
    %363 = vmatprep.subr.mxu0 0.0
    %v364 = vand.u32 %v36, 4294901760
    %v365 = vsub.f32 %v36, %v364
    %v366 = vand.u32 %v365, 4294901760
    %v367 = vsub.f32 %v365, %v366
    %v368 = vand.u32 %v367, 4294901760
    %369 = vmatpush1.msra.mxu0 %v368
    %370 = vmatprep.subr.mxu0 0.0
    %v371 = vand.u32 %v35, 4294901760
    %v372 = vsub.f32 %v35, %v371
    %v373 = vand.u32 %v372, 4294901760
    %v374 = vsub.f32 %v372, %v373
    %v375 = vand.u32 %v374, 4294901760
    %376 = vmatpush1.msra.mxu0 %v375
    %377 = vmatprep.subr.mxu0 0.0
    %v378 = vand.u32 %v34, 4294901760
    %v379 = vsub.f32 %v34, %v378
    %v380 = vand.u32 %v379, 4294901760
    %v381 = vsub.f32 %v379, %v380
    %v382 = vand.u32 %v381, 4294901760
    %383 = vmatpush1.msra.mxu0 %v382
    %384 = vmatprep.subr.mxu0 0.0
    %385 = vmatpush2.msra.mxu0 0.0
    %386 = vmatprep.subr.mxu0 0.0
    %387 = vmatpush2.msra.mxu0 0.0
    %388 = vmatprep.subr.mxu0 0.0
    %389 = vmatpush2.msra.mxu0 0.0
    %390 = vmatprep.subr.mxu0 0.0
    %391 = vmatpush2.msra.mxu0 0.0
    %392 = vmatprep.subr.mxu0 0.0
    %393 = vmatpush2.msra.mxu0 0.0
    %394 = vmatprep.subr.mxu0 0.0
    %395 = vmatpush2.msra.mxu0 0.0
    %396 = vmatprep.subr.mxu0 0.0
    %397 = vmatpush2.msra.mxu0 0.0
    %398 = vmatprep.subr.mxu0 0.0
    %399 = vmatpush2.msra.mxu0 0.0
    %400 = vmatprep.subr.mxu0 0.0
    %401 = vmatpush2.msra.mxu0 0.0
    %402 = vmatprep.subr.mxu0 0.0
    %403 = vmatpush2.msra.mxu0 0.0
    %404 = vmatprep.subr.mxu0 0.0
    %405 = vmatpush2.msra.mxu0 0.0
    %406 = vmatprep.subr.mxu0 0.0
    %407 = vmatpush2.msra.mxu0 0.0
    %408 = vmatprep.subr.mxu0 0.0
    %409 = vmatpush2.msra.mxu0 0.0
    %410 = vmatprep.subr.mxu0 0.0
    %411 = vmatpush2.msra.mxu0 0.0
    %412 = vmatprep.subr.mxu0 0.0
    %413 = vmatpush2.msra.mxu0 0.0
    %414 = vmatprep.subr.mxu0 0.0
    %415 = vmatpush2.msra.mxu0 0.0
    %416 = vmatprep.mubr.f32.mxu0 0.0
    %v417 = vand.u32 %v56, 4294901760
    %418 = vmatmul.mubr.f32.gmra.mxu0 %v417
    %v419 = vpop.f32.mrf.mxu0
    %v420 = vadd.f32 %v179, %v419
    %v421 = vpop.f32.mrf.mxu0
    %422 = vmatprep.mubr.f32.mxu0 0.0
    %v423 = vand.u32 %v59, 4294901760
    %424 = vmatmul.mubr.f32.gmra.mxu0 %v423
    %v425 = vpop.f32.mrf.mxu0
    %v426 = vadd.f32 %v189, %v425
    %v427 = vpop.f32.mrf.mxu0
    %428 = vmatprep.mubr.f32.mxu0 0.0
    %v429 = vand.u32 %v62, 4294901760
    %430 = vmatmul.mubr.f32.gmra.mxu0 %v429
    %v431 = vpop.f32.mrf.mxu0
    %v432 = vadd.f32 %v199, %v431
    %v433 = vpop.f32.mrf.mxu0
    %434 = vmatprep.mubr.f32.mxu0 0.0
    %v435 = vand.u32 %v65, 4294901760
    %436 = vmatmul.mubr.f32.gmra.mxu0 %v435
    %v437 = vpop.f32.mrf.mxu0
    %v438 = vadd.f32 %v209, %v437
    %v439 = vpop.f32.mrf.mxu0
    %440 = vmatprep.mubr.f32.mxu0 0.0
    %v441 = vand.u32 %v68, 4294901760
    %442 = vmatmul.mubr.f32.gmra.mxu0 %v441
    %v443 = vpop.f32.mrf.mxu0
    %v444 = vadd.f32 %v219, %v443
    %v445 = vpop.f32.mrf.mxu0
    %446 = vmatprep.mubr.f32.mxu0 0.0
    %v447 = vand.u32 %v71, 4294901760
    %448 = vmatmul.mubr.f32.gmra.mxu0 %v447
    %v449 = vpop.f32.mrf.mxu0
    %v450 = vadd.f32 %v229, %v449
    %v451 = vpop.f32.mrf.mxu0
    %452 = vmatprep.mubr.f32.mxu0 0.0
    %v453 = vand.u32 %v74, 4294901760
    %454 = vmatmul.mubr.f32.gmra.mxu0 %v453
    %v455 = vpop.f32.mrf.mxu0
    %v456 = vadd.f32 %v239, %v455
    %v457 = vpop.f32.mrf.mxu0
    %458 = vmatprep.mubr.f32.mxu0 0.0
    %v459 = vand.u32 %v77, 4294901760
    %460 = vmatmul.mubr.f32.gmra.mxu0 %v459
    %v461 = vpop.f32.mrf.mxu0
    %v462 = vadd.f32 %v249, %v461
    %v463 = vpop.f32.mrf.mxu0
    %464 = vmatprep.mubr.f32.mxu0 0.0
    %v465 = vand.u32 %v80, 4294901760
    %466 = vmatmul.mubr.f32.gmra.mxu0 %v465
    %v467 = vpop.f32.mrf.mxu0
    %v468 = vadd.f32 %v259, %v467
    %v469 = vpop.f32.mrf.mxu0
    %470 = vmatprep.mubr.f32.mxu0 0.0
    %v471 = vand.u32 %v83, 4294901760
    %472 = vmatmul.mubr.f32.gmra.mxu0 %v471
    %v473 = vpop.f32.mrf.mxu0
    %v474 = vadd.f32 %v269, %v473
    %v475 = vpop.f32.mrf.mxu0
    %476 = vmatprep.mubr.f32.mxu0 0.0
    %v477 = vand.u32 %v86, 4294901760
    %478 = vmatmul.mubr.f32.gmra.mxu0 %v477
    %v479 = vpop.f32.mrf.mxu0
    %v480 = vadd.f32 %v279, %v479
    %v481 = vpop.f32.mrf.mxu0
    %482 = vmatprep.mubr.f32.mxu0 0.0
    %v483 = vand.u32 %v89, 4294901760
    %484 = vmatmul.mubr.f32.gmra.mxu0 %v483
    %v485 = vpop.f32.mrf.mxu0
    %v486 = vadd.f32 %v289, %v485
    %v487 = vpop.f32.mrf.mxu0
    %488 = vmatprep.mubr.f32.mxu0 0.0
    %v489 = vand.u32 %v92, 4294901760
    %490 = vmatmul.mubr.f32.gmra.mxu0 %v489
    %v491 = vpop.f32.mrf.mxu0
    %v492 = vadd.f32 %v299, %v491
    %v493 = vpop.f32.mrf.mxu0
    %494 = vmatprep.mubr.f32.mxu0 0.0
    %v495 = vand.u32 %v95, 4294901760
    %496 = vmatmul.mubr.f32.gmra.mxu0 %v495
    %v497 = vpop.f32.mrf.mxu0
    %v498 = vadd.f32 %v309, %v497
    %v499 = vpop.f32.mrf.mxu0
    %500 = vmatprep.mubr.f32.mxu0 0.0
    %v501 = vand.u32 %v98, 4294901760
    %502 = vmatmul.mubr.f32.gmra.mxu0 %v501
    %v503 = vpop.f32.mrf.mxu0
    %v504 = vadd.f32 %v319, %v503
    %v505 = vpop.f32.mrf.mxu0
    %506 = vmatprep.mubr.f32.mxu0 0.0
    %v507 = vand.u32 %v101, 4294901760
    %508 = vmatmul.mubr.f32.gmra.mxu0 %v507
    %v509 = vpop.f32.mrf.mxu0
    %v510 = vadd.f32 %v329, %v509
    %v511 = vpop.f32.mrf.mxu0
    %512 = vdwg.mxu0
    %513 = vmatprep.subr.mxu0 0.0
    %514 = vmatpush1.msra.mxu0 0.0
    %515 = vmatprep.subr.mxu0 0.0
    %516 = vmatpush1.msra.mxu0 0.0
    %517 = vmatprep.subr.mxu0 0.0
    %518 = vmatpush1.msra.mxu0 0.0
    %519 = vmatprep.subr.mxu0 0.0
    %520 = vmatpush1.msra.mxu0 0.0
    %521 = vmatprep.subr.mxu0 0.0
    %522 = vmatpush1.msra.mxu0 0.0
    %523 = vmatprep.subr.mxu0 0.0
    %524 = vmatpush1.msra.mxu0 0.0
    %525 = vmatprep.subr.mxu0 0.0
    %526 = vmatpush1.msra.mxu0 0.0
    %527 = vmatprep.subr.mxu0 0.0
    %528 = vmatpush1.msra.mxu0 0.0
    %529 = vmatprep.subr.mxu0 0.0
    %530 = vmatpush1.msra.mxu0 0.0
    %531 = vmatprep.subr.mxu0 0.0
    %532 = vmatpush1.msra.mxu0 0.0
    %533 = vmatprep.subr.mxu0 0.0
    %534 = vmatpush1.msra.mxu0 0.0
    %535 = vmatprep.subr.mxu0 0.0
    %536 = vmatpush1.msra.mxu0 0.0
    %537 = vmatprep.subr.mxu0 0.0
    %v538 = vand.u32 %v37, 4294901760
    %v539 = vsub.f32 %v37, %v538
    %540 = vmatpush1.msra.mxu0 %v539
    %541 = vmatprep.subr.mxu0 0.0
    %v542 = vand.u32 %v36, 4294901760
    %v543 = vsub.f32 %v36, %v542
    %544 = vmatpush1.msra.mxu0 %v543
    %545 = vmatprep.subr.mxu0 0.0
    %v546 = vand.u32 %v35, 4294901760
    %v547 = vsub.f32 %v35, %v546
    %548 = vmatpush1.msra.mxu0 %v547
    %549 = vmatprep.subr.mxu0 0.0
    %v550 = vand.u32 %v34, 4294901760
    %v551 = vsub.f32 %v34, %v550
    %552 = vmatpush1.msra.mxu0 %v551
    %553 = vmatprep.subr.mxu0 0.0
    %554 = vmatpush2.msra.mxu0 0.0
    %555 = vmatprep.subr.mxu0 0.0
    %556 = vmatpush2.msra.mxu0 0.0
    %557 = vmatprep.subr.mxu0 0.0
    %558 = vmatpush2.msra.mxu0 0.0
    %559 = vmatprep.subr.mxu0 0.0
    %560 = vmatpush2.msra.mxu0 0.0
    %561 = vmatprep.subr.mxu0 0.0
    %562 = vmatpush2.msra.mxu0 0.0
    %563 = vmatprep.subr.mxu0 0.0
    %564 = vmatpush2.msra.mxu0 0.0
    %565 = vmatprep.subr.mxu0 0.0
    %566 = vmatpush2.msra.mxu0 0.0
    %567 = vmatprep.subr.mxu0 0.0
    %568 = vmatpush2.msra.mxu0 0.0
    %569 = vmatprep.subr.mxu0 0.0
    %570 = vmatpush2.msra.mxu0 0.0
    %571 = vmatprep.subr.mxu0 0.0
    %572 = vmatpush2.msra.mxu0 0.0
    %573 = vmatprep.subr.mxu0 0.0
    %574 = vmatpush2.msra.mxu0 0.0
    %575 = vmatprep.subr.mxu0 0.0
    %576 = vmatpush2.msra.mxu0 0.0
    %577 = vmatprep.subr.mxu0 0.0
    %578 = vmatpush2.msra.mxu0 0.0
    %579 = vmatprep.subr.mxu0 0.0
    %580 = vmatpush2.msra.mxu0 0.0
    %581 = vmatprep.subr.mxu0 0.0
    %582 = vmatpush2.msra.mxu0 0.0
    %583 = vmatprep.subr.mxu0 0.0
    %584 = vmatpush2.msra.mxu0 0.0
    %585 = vmatprep.mubr.f32.mxu0 0.0
    %v586 = vand.u32 %v56, 4294901760
    %v587 = vsub.f32 %v56, %v586
    %588 = vmatmul.mubr.f32.gmra.mxu0 %v587
    %v589 = vpop.f32.mrf.mxu0
    %v590 = vadd.f32 %v420, %v589
    %v591 = vpop.f32.mrf.mxu0
    %592 = vmatprep.mubr.f32.mxu0 0.0
    %v593 = vand.u32 %v59, 4294901760
    %v594 = vsub.f32 %v59, %v593
    %595 = vmatmul.mubr.f32.gmra.mxu0 %v594
    %v596 = vpop.f32.mrf.mxu0
    %v597 = vadd.f32 %v426, %v596
    %v598 = vpop.f32.mrf.mxu0
    %599 = vmatprep.mubr.f32.mxu0 0.0
    %v600 = vand.u32 %v62, 4294901760
    %v601 = vsub.f32 %v62, %v600
    %602 = vmatmul.mubr.f32.gmra.mxu0 %v601
    %v603 = vpop.f32.mrf.mxu0
    %v604 = vadd.f32 %v432, %v603
    %v605 = vpop.f32.mrf.mxu0
    %606 = vmatprep.mubr.f32.mxu0 0.0
    %v607 = vand.u32 %v65, 4294901760
    %v608 = vsub.f32 %v65, %v607
    %609 = vmatmul.mubr.f32.gmra.mxu0 %v608
    %v610 = vpop.f32.mrf.mxu0
    %v611 = vadd.f32 %v438, %v610
    %v612 = vpop.f32.mrf.mxu0
    %613 = vmatprep.mubr.f32.mxu0 0.0
    %v614 = vand.u32 %v68, 4294901760
    %v615 = vsub.f32 %v68, %v614
    %616 = vmatmul.mubr.f32.gmra.mxu0 %v615
    %v617 = vpop.f32.mrf.mxu0
    %v618 = vadd.f32 %v444, %v617
    %v619 = vpop.f32.mrf.mxu0
    %620 = vmatprep.mubr.f32.mxu0 0.0
    %v621 = vand.u32 %v71, 4294901760
    %v622 = vsub.f32 %v71, %v621
    %623 = vmatmul.mubr.f32.gmra.mxu0 %v622
    %v624 = vpop.f32.mrf.mxu0
    %v625 = vadd.f32 %v450, %v624
    %v626 = vpop.f32.mrf.mxu0
    %627 = vmatprep.mubr.f32.mxu0 0.0
    %v628 = vand.u32 %v74, 4294901760
    %v629 = vsub.f32 %v74, %v628
    %630 = vmatmul.mubr.f32.gmra.mxu0 %v629
    %v631 = vpop.f32.mrf.mxu0
    %v632 = vadd.f32 %v456, %v631
    %v633 = vpop.f32.mrf.mxu0
    %634 = vmatprep.mubr.f32.mxu0 0.0
    %v635 = vand.u32 %v77, 4294901760
    %v636 = vsub.f32 %v77, %v635
    %637 = vmatmul.mubr.f32.gmra.mxu0 %v636
    %v638 = vpop.f32.mrf.mxu0
    %v639 = vadd.f32 %v462, %v638
    %v640 = vpop.f32.mrf.mxu0
    %641 = vmatprep.mubr.f32.mxu0 0.0
    %v642 = vand.u32 %v80, 4294901760
    %v643 = vsub.f32 %v80, %v642
    %644 = vmatmul.mubr.f32.gmra.mxu0 %v643
    %v645 = vpop.f32.mrf.mxu0
    %v646 = vadd.f32 %v468, %v645
    %v647 = vpop.f32.mrf.mxu0
    %648 = vmatprep.mubr.f32.mxu0 0.0
    %v649 = vand.u32 %v83, 4294901760
    %v650 = vsub.f32 %v83, %v649
    %651 = vmatmul.mubr.f32.gmra.mxu0 %v650
    %v652 = vpop.f32.mrf.mxu0
    %v653 = vadd.f32 %v474, %v652
    %v654 = vpop.f32.mrf.mxu0
    %655 = vmatprep.mubr.f32.mxu0 0.0
    %v656 = vand.u32 %v86, 4294901760
    %v657 = vsub.f32 %v86, %v656
    %658 = vmatmul.mubr.f32.gmra.mxu0 %v657
    %v659 = vpop.f32.mrf.mxu0
    %v660 = vadd.f32 %v480, %v659
    %v661 = vpop.f32.mrf.mxu0
    %662 = vmatprep.mubr.f32.mxu0 0.0
    %v663 = vand.u32 %v89, 4294901760
    %v664 = vsub.f32 %v89, %v663
    %665 = vmatmul.mubr.f32.gmra.mxu0 %v664
    %v666 = vpop.f32.mrf.mxu0
    %v667 = vadd.f32 %v486, %v666
    %v668 = vpop.f32.mrf.mxu0
    %669 = vmatprep.mubr.f32.mxu0 0.0
    %v670 = vand.u32 %v92, 4294901760
    %v671 = vsub.f32 %v92, %v670
    %672 = vmatmul.mubr.f32.gmra.mxu0 %v671
    %v673 = vpop.f32.mrf.mxu0
    %v674 = vadd.f32 %v492, %v673
    %v675 = vpop.f32.mrf.mxu0
    %676 = vmatprep.mubr.f32.mxu0 0.0
    %v677 = vand.u32 %v95, 4294901760
    %v678 = vsub.f32 %v95, %v677
    %679 = vmatmul.mubr.f32.gmra.mxu0 %v678
    %v680 = vpop.f32.mrf.mxu0
    %v681 = vadd.f32 %v498, %v680
    %v682 = vpop.f32.mrf.mxu0
    %683 = vmatprep.mubr.f32.mxu0 0.0
    %v684 = vand.u32 %v98, 4294901760
    %v685 = vsub.f32 %v98, %v684
    %686 = vmatmul.mubr.f32.gmra.mxu0 %v685
    %v687 = vpop.f32.mrf.mxu0
    %v688 = vadd.f32 %v504, %v687
    %v689 = vpop.f32.mrf.mxu0
    %690 = vmatprep.mubr.f32.mxu0 0.0
    %v691 = vand.u32 %v101, 4294901760
    %v692 = vsub.f32 %v101, %v691
    %693 = vmatmul.mubr.f32.gmra.mxu0 %v692
    %v694 = vpop.f32.mrf.mxu0
    %v695 = vadd.f32 %v510, %v694
    %v696 = vpop.f32.mrf.mxu0
    %697 = vdwg.mxu0
    %698 = vmatprep.subr.mxu0 0.0
    %699 = vmatpush1.msra.mxu0 0.0
    %700 = vmatprep.subr.mxu0 0.0
    %701 = vmatpush1.msra.mxu0 0.0
    %702 = vmatprep.subr.mxu0 0.0
    %703 = vmatpush1.msra.mxu0 0.0
    %704 = vmatprep.subr.mxu0 0.0
    %705 = vmatpush1.msra.mxu0 0.0
    %706 = vmatprep.subr.mxu0 0.0
    %707 = vmatpush1.msra.mxu0 0.0
    %708 = vmatprep.subr.mxu0 0.0
    %709 = vmatpush1.msra.mxu0 0.0
    %710 = vmatprep.subr.mxu0 0.0
    %711 = vmatpush1.msra.mxu0 0.0
    %712 = vmatprep.subr.mxu0 0.0
    %713 = vmatpush1.msra.mxu0 0.0
    %714 = vmatprep.subr.mxu0 0.0
    %715 = vmatpush1.msra.mxu0 0.0
    %716 = vmatprep.subr.mxu0 0.0
    %717 = vmatpush1.msra.mxu0 0.0
    %718 = vmatprep.subr.mxu0 0.0
    %719 = vmatpush1.msra.mxu0 0.0
    %720 = vmatprep.subr.mxu0 0.0
    %721 = vmatpush1.msra.mxu0 0.0
    %722 = vmatprep.subr.mxu0 0.0
    %v723 = vand.u32 %v37, 4294901760
    %724 = vmatpush1.msra.mxu0 %v723
    %725 = vmatprep.subr.mxu0 0.0
    %v726 = vand.u32 %v36, 4294901760
    %727 = vmatpush1.msra.mxu0 %v726
    %728 = vmatprep.subr.mxu0 0.0
    %v729 = vand.u32 %v35, 4294901760
    %730 = vmatpush1.msra.mxu0 %v729
    %731 = vmatprep.subr.mxu0 0.0
    %v732 = vand.u32 %v34, 4294901760
    %733 = vmatpush1.msra.mxu0 %v732
    %734 = vmatprep.subr.mxu0 0.0
    %735 = vmatpush2.msra.mxu0 0.0
    %736 = vmatprep.subr.mxu0 0.0
    %737 = vmatpush2.msra.mxu0 0.0
    %738 = vmatprep.subr.mxu0 0.0
    %739 = vmatpush2.msra.mxu0 0.0
    %740 = vmatprep.subr.mxu0 0.0
    %741 = vmatpush2.msra.mxu0 0.0
    %742 = vmatprep.subr.mxu0 0.0
    %743 = vmatpush2.msra.mxu0 0.0
    %744 = vmatprep.subr.mxu0 0.0
    %745 = vmatpush2.msra.mxu0 0.0
    %746 = vmatprep.subr.mxu0 0.0
    %747 = vmatpush2.msra.mxu0 0.0
    %748 = vmatprep.subr.mxu0 0.0
    %749 = vmatpush2.msra.mxu0 0.0
    %750 = vmatprep.subr.mxu0 0.0
    %751 = vmatpush2.msra.mxu0 0.0
    %752 = vmatprep.subr.mxu0 0.0
    %753 = vmatpush2.msra.mxu0 0.0
    %754 = vmatprep.subr.mxu0 0.0
    %755 = vmatpush2.msra.mxu0 0.0
    %756 = vmatprep.subr.mxu0 0.0
    %757 = vmatpush2.msra.mxu0 0.0
    %758 = vmatprep.subr.mxu0 0.0
    %759 = vmatpush2.msra.mxu0 0.0
    %760 = vmatprep.subr.mxu0 0.0
    %761 = vmatpush2.msra.mxu0 0.0
    %762 = vmatprep.subr.mxu0 0.0
    %763 = vmatpush2.msra.mxu0 0.0
    %764 = vmatprep.subr.mxu0 0.0
    %765 = vmatpush2.msra.mxu0 0.0
    %766 = vmatprep.mubr.f32.mxu0 0.0
    %v767 = vand.u32 %v56, 4294901760
    %v768 = vsub.f32 %v56, %v767
    %v769 = vand.u32 %v768, 4294901760
    %770 = vmatmul.mubr.f32.gmra.mxu0 %v769
    %v771 = vpop.f32.mrf.mxu0
    %v772 = vadd.f32 %v590, %v771
    %v773 = vpop.f32.mrf.mxu0
    %774 = vmatprep.mubr.f32.mxu0 0.0
    %v775 = vand.u32 %v59, 4294901760
    %v776 = vsub.f32 %v59, %v775
    %v777 = vand.u32 %v776, 4294901760
    %778 = vmatmul.mubr.f32.gmra.mxu0 %v777
    %v779 = vpop.f32.mrf.mxu0
    %v780 = vadd.f32 %v597, %v779
    %v781 = vpop.f32.mrf.mxu0
    %782 = vmatprep.mubr.f32.mxu0 0.0
    %v783 = vand.u32 %v62, 4294901760
    %v784 = vsub.f32 %v62, %v783
    %v785 = vand.u32 %v784, 4294901760
    %786 = vmatmul.mubr.f32.gmra.mxu0 %v785
    %v787 = vpop.f32.mrf.mxu0
    %v788 = vadd.f32 %v604, %v787
    %v789 = vpop.f32.mrf.mxu0
    %790 = vmatprep.mubr.f32.mxu0 0.0
    %v791 = vand.u32 %v65, 4294901760
    %v792 = vsub.f32 %v65, %v791
    %v793 = vand.u32 %v792, 4294901760
    %794 = vmatmul.mubr.f32.gmra.mxu0 %v793
    %v795 = vpop.f32.mrf.mxu0
    %v796 = vadd.f32 %v611, %v795
    %v797 = vpop.f32.mrf.mxu0
    %798 = vmatprep.mubr.f32.mxu0 0.0
    %v799 = vand.u32 %v68, 4294901760
    %v800 = vsub.f32 %v68, %v799
    %v801 = vand.u32 %v800, 4294901760
    %802 = vmatmul.mubr.f32.gmra.mxu0 %v801
    %v803 = vpop.f32.mrf.mxu0
    %v804 = vadd.f32 %v618, %v803
    %v805 = vpop.f32.mrf.mxu0
    %806 = vmatprep.mubr.f32.mxu0 0.0
    %v807 = vand.u32 %v71, 4294901760
    %v808 = vsub.f32 %v71, %v807
    %v809 = vand.u32 %v808, 4294901760
    %810 = vmatmul.mubr.f32.gmra.mxu0 %v809
    %v811 = vpop.f32.mrf.mxu0
    %v812 = vadd.f32 %v625, %v811
    %v813 = vpop.f32.mrf.mxu0
    %814 = vmatprep.mubr.f32.mxu0 0.0
    %v815 = vand.u32 %v74, 4294901760
    %v816 = vsub.f32 %v74, %v815
    %v817 = vand.u32 %v816, 4294901760
    %818 = vmatmul.mubr.f32.gmra.mxu0 %v817
    %v819 = vpop.f32.mrf.mxu0
    %v820 = vadd.f32 %v632, %v819
    %v821 = vpop.f32.mrf.mxu0
    %822 = vmatprep.mubr.f32.mxu0 0.0
    %v823 = vand.u32 %v77, 4294901760
    %v824 = vsub.f32 %v77, %v823
    %v825 = vand.u32 %v824, 4294901760
    %826 = vmatmul.mubr.f32.gmra.mxu0 %v825
    %v827 = vpop.f32.mrf.mxu0
    %v828 = vadd.f32 %v639, %v827
    %v829 = vpop.f32.mrf.mxu0
    %830 = vmatprep.mubr.f32.mxu0 0.0
    %v831 = vand.u32 %v80, 4294901760
    %v832 = vsub.f32 %v80, %v831
    %v833 = vand.u32 %v832, 4294901760
    %834 = vmatmul.mubr.f32.gmra.mxu0 %v833
    %v835 = vpop.f32.mrf.mxu0
    %v836 = vadd.f32 %v646, %v835
    %v837 = vpop.f32.mrf.mxu0
    %838 = vmatprep.mubr.f32.mxu0 0.0
    %v839 = vand.u32 %v83, 4294901760
    %v840 = vsub.f32 %v83, %v839
    %v841 = vand.u32 %v840, 4294901760
    %842 = vmatmul.mubr.f32.gmra.mxu0 %v841
    %v843 = vpop.f32.mrf.mxu0
    %v844 = vadd.f32 %v653, %v843
    %v845 = vpop.f32.mrf.mxu0
    %846 = vmatprep.mubr.f32.mxu0 0.0
    %v847 = vand.u32 %v86, 4294901760
    %v848 = vsub.f32 %v86, %v847
    %v849 = vand.u32 %v848, 4294901760
    %850 = vmatmul.mubr.f32.gmra.mxu0 %v849
    %v851 = vpop.f32.mrf.mxu0
    %v852 = vadd.f32 %v660, %v851
    %v853 = vpop.f32.mrf.mxu0
    %854 = vmatprep.mubr.f32.mxu0 0.0
    %v855 = vand.u32 %v89, 4294901760
    %v856 = vsub.f32 %v89, %v855
    %v857 = vand.u32 %v856, 4294901760
    %858 = vmatmul.mubr.f32.gmra.mxu0 %v857
    %v859 = vpop.f32.mrf.mxu0
    %v860 = vadd.f32 %v667, %v859
    %v861 = vpop.f32.mrf.mxu0
    %862 = vmatprep.mubr.f32.mxu0 0.0
    %v863 = vand.u32 %v92, 4294901760
    %v864 = vsub.f32 %v92, %v863
    %v865 = vand.u32 %v864, 4294901760
    %866 = vmatmul.mubr.f32.gmra.mxu0 %v865
    %v867 = vpop.f32.mrf.mxu0
    %v868 = vadd.f32 %v674, %v867
    %v869 = vpop.f32.mrf.mxu0
    %870 = vmatprep.mubr.f32.mxu0 0.0
    %v871 = vand.u32 %v95, 4294901760
    %v872 = vsub.f32 %v95, %v871
    %v873 = vand.u32 %v872, 4294901760
    %874 = vmatmul.mubr.f32.gmra.mxu0 %v873
    %v875 = vpop.f32.mrf.mxu0
    %v876 = vadd.f32 %v681, %v875
    %v877 = vpop.f32.mrf.mxu0
    %878 = vmatprep.mubr.f32.mxu0 0.0
    %v879 = vand.u32 %v98, 4294901760
    %v880 = vsub.f32 %v98, %v879
    %v881 = vand.u32 %v880, 4294901760
    %882 = vmatmul.mubr.f32.gmra.mxu0 %v881
    %v883 = vpop.f32.mrf.mxu0
    %v884 = vadd.f32 %v688, %v883
    %v885 = vpop.f32.mrf.mxu0
    %886 = vmatprep.mubr.f32.mxu0 0.0
    %v887 = vand.u32 %v101, 4294901760
    %v888 = vsub.f32 %v101, %v887
    %v889 = vand.u32 %v888, 4294901760
    %890 = vmatmul.mubr.f32.gmra.mxu0 %v889
    %v891 = vpop.f32.mrf.mxu0
    %v892 = vadd.f32 %v695, %v891
    %v893 = vpop.f32.mrf.mxu0
    %894 = vdwg.mxu0
    %895 = vmatprep.subr.mxu0 0.0
    %896 = vmatpush1.msra.mxu0 0.0
    %897 = vmatprep.subr.mxu0 0.0
    %898 = vmatpush1.msra.mxu0 0.0
    %899 = vmatprep.subr.mxu0 0.0
    %900 = vmatpush1.msra.mxu0 0.0
    %901 = vmatprep.subr.mxu0 0.0
    %902 = vmatpush1.msra.mxu0 0.0
    %903 = vmatprep.subr.mxu0 0.0
    %904 = vmatpush1.msra.mxu0 0.0
    %905 = vmatprep.subr.mxu0 0.0
    %906 = vmatpush1.msra.mxu0 0.0
    %907 = vmatprep.subr.mxu0 0.0
    %908 = vmatpush1.msra.mxu0 0.0
    %909 = vmatprep.subr.mxu0 0.0
    %910 = vmatpush1.msra.mxu0 0.0
    %911 = vmatprep.subr.mxu0 0.0
    %912 = vmatpush1.msra.mxu0 0.0
    %913 = vmatprep.subr.mxu0 0.0
    %914 = vmatpush1.msra.mxu0 0.0
    %915 = vmatprep.subr.mxu0 0.0
    %916 = vmatpush1.msra.mxu0 0.0
    %917 = vmatprep.subr.mxu0 0.0
    %918 = vmatpush1.msra.mxu0 0.0
    %919 = vmatprep.subr.mxu0 0.0
    %v920 = vand.u32 %v37, 4294901760
    %v921 = vsub.f32 %v37, %v920
    %v922 = vand.u32 %v921, 4294901760
    %923 = vmatpush1.msra.mxu0 %v922
    %924 = vmatprep.subr.mxu0 0.0
    %v925 = vand.u32 %v36, 4294901760
    %v926 = vsub.f32 %v36, %v925
    %v927 = vand.u32 %v926, 4294901760
    %928 = vmatpush1.msra.mxu0 %v927
    %929 = vmatprep.subr.mxu0 0.0
    %v930 = vand.u32 %v35, 4294901760
    %v931 = vsub.f32 %v35, %v930
    %v932 = vand.u32 %v931, 4294901760
    %933 = vmatpush1.msra.mxu0 %v932
    %934 = vmatprep.subr.mxu0 0.0
    %v935 = vand.u32 %v34, 4294901760
    %v936 = vsub.f32 %v34, %v935
    %v937 = vand.u32 %v936, 4294901760
    %938 = vmatpush1.msra.mxu0 %v937
    %939 = vmatprep.subr.mxu0 0.0
    %940 = vmatpush2.msra.mxu0 0.0
    %941 = vmatprep.subr.mxu0 0.0
    %942 = vmatpush2.msra.mxu0 0.0
    %943 = vmatprep.subr.mxu0 0.0
    %944 = vmatpush2.msra.mxu0 0.0
    %945 = vmatprep.subr.mxu0 0.0
    %946 = vmatpush2.msra.mxu0 0.0
    %947 = vmatprep.subr.mxu0 0.0
    %948 = vmatpush2.msra.mxu0 0.0
    %949 = vmatprep.subr.mxu0 0.0
    %950 = vmatpush2.msra.mxu0 0.0
    %951 = vmatprep.subr.mxu0 0.0
    %952 = vmatpush2.msra.mxu0 0.0
    %953 = vmatprep.subr.mxu0 0.0
    %954 = vmatpush2.msra.mxu0 0.0
    %955 = vmatprep.subr.mxu0 0.0
    %956 = vmatpush2.msra.mxu0 0.0
    %957 = vmatprep.subr.mxu0 0.0
    %958 = vmatpush2.msra.mxu0 0.0
    %959 = vmatprep.subr.mxu0 0.0
    %960 = vmatpush2.msra.mxu0 0.0
    %961 = vmatprep.subr.mxu0 0.0
    %962 = vmatpush2.msra.mxu0 0.0
    %963 = vmatprep.subr.mxu0 0.0
    %964 = vmatpush2.msra.mxu0 0.0
    %965 = vmatprep.subr.mxu0 0.0
    %966 = vmatpush2.msra.mxu0 0.0
    %967 = vmatprep.subr.mxu0 0.0
    %968 = vmatpush2.msra.mxu0 0.0
    %969 = vmatprep.subr.mxu0 0.0
    %970 = vmatpush2.msra.mxu0 0.0
    %971 = vmatprep.mubr.f32.mxu0 0.0
    %v972 = vand.u32 %v56, 4294901760
    %973 = vmatmul.mubr.f32.gmra.mxu0 %v972
    %v974 = vpop.f32.mrf.mxu0
    %v975 = vadd.f32 %v772, %v974
    %v976 = vpop.f32.mrf.mxu0
    %977 = vmatprep.mubr.f32.mxu0 0.0
    %v978 = vand.u32 %v59, 4294901760
    %979 = vmatmul.mubr.f32.gmra.mxu0 %v978
    %v980 = vpop.f32.mrf.mxu0
    %v981 = vadd.f32 %v780, %v980
    %v982 = vpop.f32.mrf.mxu0
    %983 = vmatprep.mubr.f32.mxu0 0.0
    %v984 = vand.u32 %v62, 4294901760
    %985 = vmatmul.mubr.f32.gmra.mxu0 %v984
    %v986 = vpop.f32.mrf.mxu0
    %v987 = vadd.f32 %v788, %v986
    %v988 = vpop.f32.mrf.mxu0
    %989 = vmatprep.mubr.f32.mxu0 0.0
    %v990 = vand.u32 %v65, 4294901760
    %991 = vmatmul.mubr.f32.gmra.mxu0 %v990
    %v992 = vpop.f32.mrf.mxu0
    %v993 = vadd.f32 %v796, %v992
    %v994 = vpop.f32.mrf.mxu0
    %995 = vmatprep.mubr.f32.mxu0 0.0
    %v996 = vand.u32 %v68, 4294901760
    %997 = vmatmul.mubr.f32.gmra.mxu0 %v996
    %v998 = vpop.f32.mrf.mxu0
    %v999 = vadd.f32 %v804, %v998
    %v1000 = vpop.f32.mrf.mxu0
    %1001 = vmatprep.mubr.f32.mxu0 0.0
    %v1002 = vand.u32 %v71, 4294901760
    %1003 = vmatmul.mubr.f32.gmra.mxu0 %v1002
    %v1004 = vpop.f32.mrf.mxu0
    %v1005 = vadd.f32 %v812, %v1004
    %v1006 = vpop.f32.mrf.mxu0
    %1007 = vmatprep.mubr.f32.mxu0 0.0
    %v1008 = vand.u32 %v74, 4294901760
    %1009 = vmatmul.mubr.f32.gmra.mxu0 %v1008
    %v1010 = vpop.f32.mrf.mxu0
    %v1011 = vadd.f32 %v820, %v1010
    %v1012 = vpop.f32.mrf.mxu0
    %1013 = vmatprep.mubr.f32.mxu0 0.0
    %v1014 = vand.u32 %v77, 4294901760
    %1015 = vmatmul.mubr.f32.gmra.mxu0 %v1014
    %v1016 = vpop.f32.mrf.mxu0
    %v1017 = vadd.f32 %v828, %v1016
    %v1018 = vpop.f32.mrf.mxu0
    %1019 = vmatprep.mubr.f32.mxu0 0.0
    %v1020 = vand.u32 %v80, 4294901760
    %1021 = vmatmul.mubr.f32.gmra.mxu0 %v1020
    %v1022 = vpop.f32.mrf.mxu0
    %v1023 = vadd.f32 %v836, %v1022
    %v1024 = vpop.f32.mrf.mxu0
    %1025 = vmatprep.mubr.f32.mxu0 0.0
    %v1026 = vand.u32 %v83, 4294901760
    %1027 = vmatmul.mubr.f32.gmra.mxu0 %v1026
    %v1028 = vpop.f32.mrf.mxu0
    %v1029 = vadd.f32 %v844, %v1028
    %v1030 = vpop.f32.mrf.mxu0
    %1031 = vmatprep.mubr.f32.mxu0 0.0
    %v1032 = vand.u32 %v86, 4294901760
    %1033 = vmatmul.mubr.f32.gmra.mxu0 %v1032
    %v1034 = vpop.f32.mrf.mxu0
    %v1035 = vadd.f32 %v852, %v1034
    %v1036 = vpop.f32.mrf.mxu0
    %1037 = vmatprep.mubr.f32.mxu0 0.0
    %v1038 = vand.u32 %v89, 4294901760
    %1039 = vmatmul.mubr.f32.gmra.mxu0 %v1038
    %v1040 = vpop.f32.mrf.mxu0
    %v1041 = vadd.f32 %v860, %v1040
    %v1042 = vpop.f32.mrf.mxu0
    %1043 = vmatprep.mubr.f32.mxu0 0.0
    %v1044 = vand.u32 %v92, 4294901760
    %1045 = vmatmul.mubr.f32.gmra.mxu0 %v1044
    %v1046 = vpop.f32.mrf.mxu0
    %v1047 = vadd.f32 %v868, %v1046
    %v1048 = vpop.f32.mrf.mxu0
    %1049 = vmatprep.mubr.f32.mxu0 0.0
    %v1050 = vand.u32 %v95, 4294901760
    %1051 = vmatmul.mubr.f32.gmra.mxu0 %v1050
    %v1052 = vpop.f32.mrf.mxu0
    %v1053 = vadd.f32 %v876, %v1052
    %v1054 = vpop.f32.mrf.mxu0
    %1055 = vmatprep.mubr.f32.mxu0 0.0
    %v1056 = vand.u32 %v98, 4294901760
    %1057 = vmatmul.mubr.f32.gmra.mxu0 %v1056
    %v1058 = vpop.f32.mrf.mxu0
    %v1059 = vadd.f32 %v884, %v1058
    %v1060 = vpop.f32.mrf.mxu0
    %1061 = vmatprep.mubr.f32.mxu0 0.0
    %v1062 = vand.u32 %v101, 4294901760
    %1063 = vmatmul.mubr.f32.gmra.mxu0 %v1062
    %v1064 = vpop.f32.mrf.mxu0
    %v1065 = vadd.f32 %v892, %v1064
    %v1066 = vpop.f32.mrf.mxu0
    %1067 = vdwg.mxu0
    %1068 = vmatprep.subr.mxu0 0.0
    %1069 = vmatpush1.msra.mxu0 0.0
    %1070 = vmatprep.subr.mxu0 0.0
    %1071 = vmatpush1.msra.mxu0 0.0
    %1072 = vmatprep.subr.mxu0 0.0
    %1073 = vmatpush1.msra.mxu0 0.0
    %1074 = vmatprep.subr.mxu0 0.0
    %1075 = vmatpush1.msra.mxu0 0.0
    %1076 = vmatprep.subr.mxu0 0.0
    %1077 = vmatpush1.msra.mxu0 0.0
    %1078 = vmatprep.subr.mxu0 0.0
    %1079 = vmatpush1.msra.mxu0 0.0
    %1080 = vmatprep.subr.mxu0 0.0
    %1081 = vmatpush1.msra.mxu0 0.0
    %1082 = vmatprep.subr.mxu0 0.0
    %1083 = vmatpush1.msra.mxu0 0.0
    %1084 = vmatprep.subr.mxu0 0.0
    %1085 = vmatpush1.msra.mxu0 0.0
    %1086 = vmatprep.subr.mxu0 0.0
    %1087 = vmatpush1.msra.mxu0 0.0
    %1088 = vmatprep.subr.mxu0 0.0
    %1089 = vmatpush1.msra.mxu0 0.0
    %1090 = vmatprep.subr.mxu0 0.0
    %1091 = vmatpush1.msra.mxu0 0.0
    %1092 = vmatprep.subr.mxu0 0.0
    %v1093 = vand.u32 %v37, 4294901760
    %1094 = vmatpush1.msra.mxu0 %v1093
    %1095 = vmatprep.subr.mxu0 0.0
    %v1096 = vand.u32 %v36, 4294901760
    %1097 = vmatpush1.msra.mxu0 %v1096
    %1098 = vmatprep.subr.mxu0 0.0
    %v1099 = vand.u32 %v35, 4294901760
    %1100 = vmatpush1.msra.mxu0 %v1099
    %1101 = vmatprep.subr.mxu0 0.0
    %v1102 = vand.u32 %v34, 4294901760
    %1103 = vmatpush1.msra.mxu0 %v1102
    %1104 = vmatprep.subr.mxu0 0.0
    %1105 = vmatpush2.msra.mxu0 0.0
    %1106 = vmatprep.subr.mxu0 0.0
    %1107 = vmatpush2.msra.mxu0 0.0
    %1108 = vmatprep.subr.mxu0 0.0
    %1109 = vmatpush2.msra.mxu0 0.0
    %1110 = vmatprep.subr.mxu0 0.0
    %1111 = vmatpush2.msra.mxu0 0.0
    %1112 = vmatprep.subr.mxu0 0.0
    %1113 = vmatpush2.msra.mxu0 0.0
    %1114 = vmatprep.subr.mxu0 0.0
    %1115 = vmatpush2.msra.mxu0 0.0
    %1116 = vmatprep.subr.mxu0 0.0
    %1117 = vmatpush2.msra.mxu0 0.0
    %1118 = vmatprep.subr.mxu0 0.0
    %1119 = vmatpush2.msra.mxu0 0.0
    %1120 = vmatprep.subr.mxu0 0.0
    %1121 = vmatpush2.msra.mxu0 0.0
    %1122 = vmatprep.subr.mxu0 0.0
    %1123 = vmatpush2.msra.mxu0 0.0
    %1124 = vmatprep.subr.mxu0 0.0
    %1125 = vmatpush2.msra.mxu0 0.0
    %1126 = vmatprep.subr.mxu0 0.0
    %1127 = vmatpush2.msra.mxu0 0.0
    %1128 = vmatprep.subr.mxu0 0.0
    %1129 = vmatpush2.msra.mxu0 0.0
    %1130 = vmatprep.subr.mxu0 0.0
    %1131 = vmatpush2.msra.mxu0 0.0
    %1132 = vmatprep.subr.mxu0 0.0
    %1133 = vmatpush2.msra.mxu0 0.0
    %1134 = vmatprep.subr.mxu0 0.0
    %1135 = vmatpush2.msra.mxu0 0.0
    %1136 = vmatprep.mubr.f32.mxu0 0.0
    %v1137 = vand.u32 %v56, 4294901760
    %1138 = vmatmul.mubr.f32.gmra.mxu0 %v1137
    %v1139 = vpop.f32.mrf.mxu0
    %v1140 = vadd.f32 %v975, %v1139
    %v1141 = vpop.f32.mrf.mxu0
    %1142 = vmatprep.mubr.f32.mxu0 0.0
    %v1143 = vand.u32 %v59, 4294901760
    %1144 = vmatmul.mubr.f32.gmra.mxu0 %v1143
    %v1145 = vpop.f32.mrf.mxu0
    %v1146 = vadd.f32 %v981, %v1145
    %v1147 = vpop.f32.mrf.mxu0
    %1148 = vmatprep.mubr.f32.mxu0 0.0
    %v1149 = vand.u32 %v62, 4294901760
    %1150 = vmatmul.mubr.f32.gmra.mxu0 %v1149
    %v1151 = vpop.f32.mrf.mxu0
    %v1152 = vadd.f32 %v987, %v1151
    %v1153 = vpop.f32.mrf.mxu0
    %1154 = vmatprep.mubr.f32.mxu0 0.0
    %v1155 = vand.u32 %v65, 4294901760
    %1156 = vmatmul.mubr.f32.gmra.mxu0 %v1155
    %v1157 = vpop.f32.mrf.mxu0
    %v1158 = vadd.f32 %v993, %v1157
    %v1159 = vpop.f32.mrf.mxu0
    %1160 = vmatprep.mubr.f32.mxu0 0.0
    %v1161 = vand.u32 %v68, 4294901760
    %1162 = vmatmul.mubr.f32.gmra.mxu0 %v1161
    %v1163 = vpop.f32.mrf.mxu0
    %v1164 = vadd.f32 %v999, %v1163
    %v1165 = vpop.f32.mrf.mxu0
    %1166 = vmatprep.mubr.f32.mxu0 0.0
    %v1167 = vand.u32 %v71, 4294901760
    %1168 = vmatmul.mubr.f32.gmra.mxu0 %v1167
    %v1169 = vpop.f32.mrf.mxu0
    %v1170 = vadd.f32 %v1005, %v1169
    %v1171 = vpop.f32.mrf.mxu0
    %1172 = vmatprep.mubr.f32.mxu0 0.0
    %v1173 = vand.u32 %v74, 4294901760
    %1174 = vmatmul.mubr.f32.gmra.mxu0 %v1173
    %v1175 = vpop.f32.mrf.mxu0
    %v1176 = vadd.f32 %v1011, %v1175
    %v1177 = vpop.f32.mrf.mxu0
    %1178 = vmatprep.mubr.f32.mxu0 0.0
    %v1179 = vand.u32 %v77, 4294901760
    %1180 = vmatmul.mubr.f32.gmra.mxu0 %v1179
    %v1181 = vpop.f32.mrf.mxu0
    %v1182 = vadd.f32 %v1017, %v1181
    %v1183 = vpop.f32.mrf.mxu0
    %1184 = vmatprep.mubr.f32.mxu0 0.0
    %v1185 = vand.u32 %v80, 4294901760
    %1186 = vmatmul.mubr.f32.gmra.mxu0 %v1185
    %v1187 = vpop.f32.mrf.mxu0
    %v1188 = vadd.f32 %v1023, %v1187
    %v1189 = vpop.f32.mrf.mxu0
    %1190 = vmatprep.mubr.f32.mxu0 0.0
    %v1191 = vand.u32 %v83, 4294901760
    %1192 = vmatmul.mubr.f32.gmra.mxu0 %v1191
    %v1193 = vpop.f32.mrf.mxu0
    %v1194 = vadd.f32 %v1029, %v1193
    %v1195 = vpop.f32.mrf.mxu0
    %1196 = vmatprep.mubr.f32.mxu0 0.0
    %v1197 = vand.u32 %v86, 4294901760
    %1198 = vmatmul.mubr.f32.gmra.mxu0 %v1197
    %v1199 = vpop.f32.mrf.mxu0
    %v1200 = vadd.f32 %v1035, %v1199
    %v1201 = vpop.f32.mrf.mxu0
    %1202 = vmatprep.mubr.f32.mxu0 0.0
    %v1203 = vand.u32 %v89, 4294901760
    %1204 = vmatmul.mubr.f32.gmra.mxu0 %v1203
    %v1205 = vpop.f32.mrf.mxu0
    %v1206 = vadd.f32 %v1041, %v1205
    %v1207 = vpop.f32.mrf.mxu0
    %1208 = vmatprep.mubr.f32.mxu0 0.0
    %v1209 = vand.u32 %v92, 4294901760
    %1210 = vmatmul.mubr.f32.gmra.mxu0 %v1209
    %v1211 = vpop.f32.mrf.mxu0
    %v1212 = vadd.f32 %v1047, %v1211
    %v1213 = vpop.f32.mrf.mxu0
    %1214 = vmatprep.mubr.f32.mxu0 0.0
    %v1215 = vand.u32 %v95, 4294901760
    %1216 = vmatmul.mubr.f32.gmra.mxu0 %v1215
    %v1217 = vpop.f32.mrf.mxu0
    %v1218 = vadd.f32 %v1053, %v1217
    %v1219 = vpop.f32.mrf.mxu0
    %1220 = vmatprep.mubr.f32.mxu0 0.0
    %v1221 = vand.u32 %v98, 4294901760
    %1222 = vmatmul.mubr.f32.gmra.mxu0 %v1221
    %v1223 = vpop.f32.mrf.mxu0
    %v1224 = vadd.f32 %v1059, %v1223
    %v1225 = vpop.f32.mrf.mxu0
    %1226 = vmatprep.mubr.f32.mxu0 0.0
    %v1227 = vand.u32 %v101, 4294901760
    %1228 = vmatmul.mubr.f32.gmra.mxu0 %v1227
    %v1229 = vpop.f32.mrf.mxu0
    %v1230 = vadd.f32 %v1065, %v1229
    %v1231 = vpop.f32.mrf.mxu0
    %1232 = vdwg.mxu0
    %v1233 = vld [vmem:[%s2] sm:$0xff]
    %v1234 = vld [vmem:[%s2 + $0x8] sm:$0xff]
    %v1235 = vld [vmem:[%s2 + $0x10] sm:$0xff]
    %v1236 = vld [vmem:[%s2 + $0x18] sm:$0xff]
    %v1237 = vld [vmem:[%s2 + $0x20] sm:$0xff]
    %v1238 = vld [vmem:[%s2 + $0x28] sm:$0xff]
    %v1239 = vld [vmem:[%s2 + $0x30] sm:$0xff]
    %v1240 = vld [vmem:[%s2 + $0x38] sm:$0xff]
    %v1241 = vld [vmem:[%s2 + $0x40] sm:$0xff]
    %v1242 = vld [vmem:[%s2 + $0x48] sm:$0xff]
    %v1243 = vld [vmem:[%s2 + $0x50] sm:$0xff]
    %v1244 = vld [vmem:[%s2 + $0x58] sm:$0xff]
    %v1245 = vld [vmem:[%s2 + $0x60] sm:$0xff]
    %v1246 = vld [vmem:[%s2 + $0x68] sm:$0xff]
    %v1247 = vld [vmem:[%s2 + $0x70] sm:$0xff]
    %v1248 = vld [vmem:[%s2 + $0x78] sm:$0xff]
    %1250 = vset.pattern.permute.xlu0 0
    %1251 = vperm.xlu0 %1250, %v1233
    %v1252 = vpop.permute.xlu0 %1251
    %1255 = vset.pattern.permute.xlu0 0
    %1256 = vperm.xlu0 %1255, %v1234
    %v1257 = vpop.permute.xlu0 %1256
    %1260 = vset.pattern.permute.xlu0 0
    %1261 = vperm.xlu0 %1260, %v1235
    %v1262 = vpop.permute.xlu0 %1261
    %1265 = vset.pattern.permute.xlu0 0
    %1266 = vperm.xlu0 %1265, %v1236
    %v1267 = vpop.permute.xlu0 %1266
    %1270 = vset.pattern.permute.xlu0 0
    %1271 = vperm.xlu0 %1270, %v1237
    %v1272 = vpop.permute.xlu0 %1271
    %1275 = vset.pattern.permute.xlu0 0
    %1276 = vperm.xlu0 %1275, %v1238
    %v1277 = vpop.permute.xlu0 %1276
    %1280 = vset.pattern.permute.xlu0 0
    %1281 = vperm.xlu0 %1280, %v1239
    %v1282 = vpop.permute.xlu0 %1281
    %1285 = vset.pattern.permute.xlu0 0
    %1286 = vperm.xlu0 %1285, %v1240
    %v1287 = vpop.permute.xlu0 %1286
    %1290 = vset.pattern.permute.xlu0 0
    %1291 = vperm.xlu0 %1290, %v1241
    %v1292 = vpop.permute.xlu0 %1291
    %1295 = vset.pattern.permute.xlu0 0
    %1296 = vperm.xlu0 %1295, %v1242
    %v1297 = vpop.permute.xlu0 %1296
    %1300 = vset.pattern.permute.xlu0 0
    %1301 = vperm.xlu0 %1300, %v1243
    %v1302 = vpop.permute.xlu0 %1301
    %1305 = vset.pattern.permute.xlu0 0
    %1306 = vperm.xlu0 %1305, %v1244
    %v1307 = vpop.permute.xlu0 %1306
    %1310 = vset.pattern.permute.xlu0 0
    %1311 = vperm.xlu0 %1310, %v1245
    %v1312 = vpop.permute.xlu0 %1311
    %1315 = vset.pattern.permute.xlu0 0
    %1316 = vperm.xlu0 %1315, %v1246
    %v1317 = vpop.permute.xlu0 %1316
    %1320 = vset.pattern.permute.xlu0 0
    %1321 = vperm.xlu0 %1320, %v1247
    %v1322 = vpop.permute.xlu0 %1321
    %1325 = vset.pattern.permute.xlu0 0
    %1326 = vperm.xlu0 %1325, %v1248
    %v1327 = vpop.permute.xlu0 %1326
    %v1329 = vadd.f32 %v1140, %v1252
    %v1330 = vadd.f32 %v1146, %v1257
    %v1331 = vadd.f32 %v1152, %v1262
    %v1332 = vadd.f32 %v1158, %v1267
    %v1333 = vadd.f32 %v1164, %v1272
    %v1334 = vadd.f32 %v1170, %v1277
    %v1335 = vadd.f32 %v1176, %v1282
    %v1336 = vadd.f32 %v1182, %v1287
    %v1337 = vadd.f32 %v1188, %v1292
    %v1338 = vadd.f32 %v1194, %v1297
    %v1339 = vadd.f32 %v1200, %v1302
    %v1340 = vadd.f32 %v1206, %v1307
    %v1341 = vadd.f32 %v1212, %v1312
    %v1342 = vadd.f32 %v1218, %v1317
    %v1343 = vadd.f32 %v1224, %v1322
    %v1344 = vadd.f32 %v1230, %v1327
    %v1345 = vmax.f32 %v1329, 0.0
    %v1346 = vmax.f32 %v1330, 0.0
    %v1347 = vmax.f32 %v1331, 0.0
    %v1348 = vmax.f32 %v1332, 0.0
    %v1349 = vmax.f32 %v1333, 0.0
    %v1350 = vmax.f32 %v1334, 0.0
    %v1351 = vmax.f32 %v1335, 0.0
    %v1352 = vmax.f32 %v1336, 0.0
    %v1353 = vmax.f32 %v1337, 0.0
    %v1354 = vmax.f32 %v1338, 0.0
    %v1355 = vmax.f32 %v1339, 0.0
    %v1356 = vmax.f32 %v1340, 0.0
    %v1357 = vmax.f32 %v1341, 0.0
    %v1358 = vmax.f32 %v1342, 0.0
    %v1359 = vmax.f32 %v1343, 0.0
    %v1360 = vmax.f32 %v1344, 0.0
    %v1361 = vld [vmem:[%s3] sm:$0xff]
    %1362 = vmatprep.subr.mxu0 0.0
    %v1363 = vand.u32 %v1360, 4294901760
    %1364 = vmatpush1.msra.mxu0 %v1363
    %1365 = vmatprep.subr.mxu0 0.0
    %v1366 = vand.u32 %v1359, 4294901760
    %1367 = vmatpush1.msra.mxu0 %v1366
    %1368 = vmatprep.subr.mxu0 0.0
    %v1369 = vand.u32 %v1358, 4294901760
    %1370 = vmatpush1.msra.mxu0 %v1369
    %1371 = vmatprep.subr.mxu0 0.0
    %v1372 = vand.u32 %v1357, 4294901760
    %1373 = vmatpush1.msra.mxu0 %v1372
    %1374 = vmatprep.subr.mxu0 0.0
    %v1375 = vand.u32 %v1356, 4294901760
    %1376 = vmatpush1.msra.mxu0 %v1375
    %1377 = vmatprep.subr.mxu0 0.0
    %v1378 = vand.u32 %v1355, 4294901760
    %1379 = vmatpush1.msra.mxu0 %v1378
    %1380 = vmatprep.subr.mxu0 0.0
    %v1381 = vand.u32 %v1354, 4294901760
    %1382 = vmatpush1.msra.mxu0 %v1381
    %1383 = vmatprep.subr.mxu0 0.0
    %v1384 = vand.u32 %v1353, 4294901760
    %1385 = vmatpush1.msra.mxu0 %v1384
    %1386 = vmatprep.subr.mxu0 0.0
    %v1387 = vand.u32 %v1352, 4294901760
    %1388 = vmatpush1.msra.mxu0 %v1387
    %1389 = vmatprep.subr.mxu0 0.0
    %v1390 = vand.u32 %v1351, 4294901760
    %1391 = vmatpush1.msra.mxu0 %v1390
    %1392 = vmatprep.subr.mxu0 0.0
    %v1393 = vand.u32 %v1350, 4294901760
    %1394 = vmatpush1.msra.mxu0 %v1393
    %1395 = vmatprep.subr.mxu0 0.0
    %v1396 = vand.u32 %v1349, 4294901760
    %1397 = vmatpush1.msra.mxu0 %v1396
    %1398 = vmatprep.subr.mxu0 0.0
    %v1399 = vand.u32 %v1348, 4294901760
    %1400 = vmatpush1.msra.mxu0 %v1399
    %1401 = vmatprep.subr.mxu0 0.0
    %v1402 = vand.u32 %v1347, 4294901760
    %1403 = vmatpush1.msra.mxu0 %v1402
    %1404 = vmatprep.subr.mxu0 0.0
    %v1405 = vand.u32 %v1346, 4294901760
    %1406 = vmatpush1.msra.mxu0 %v1405
    %1407 = vmatprep.subr.mxu0 0.0
    %v1408 = vand.u32 %v1345, 4294901760
    %1409 = vmatpush1.msra.mxu0 %v1408
    %1410 = vmatprep.subr.mxu0 0.0
    %1411 = vmatpush2.msra.mxu0 0.0
    %1412 = vmatprep.subr.mxu0 0.0
    %1413 = vmatpush2.msra.mxu0 0.0
    %1414 = vmatprep.subr.mxu0 0.0
    %1415 = vmatpush2.msra.mxu0 0.0
    %1416 = vmatprep.subr.mxu0 0.0
    %1417 = vmatpush2.msra.mxu0 0.0
    %1418 = vmatprep.subr.mxu0 0.0
    %1419 = vmatpush2.msra.mxu0 0.0
    %1420 = vmatprep.subr.mxu0 0.0
    %1421 = vmatpush2.msra.mxu0 0.0
    %1422 = vmatprep.subr.mxu0 0.0
    %1423 = vmatpush2.msra.mxu0 0.0
    %1424 = vmatprep.subr.mxu0 0.0
    %1425 = vmatpush2.msra.mxu0 0.0
    %1426 = vmatprep.subr.mxu0 0.0
    %1427 = vmatpush2.msra.mxu0 0.0
    %1428 = vmatprep.subr.mxu0 0.0
    %1429 = vmatpush2.msra.mxu0 0.0
    %1430 = vmatprep.subr.mxu0 0.0
    %1431 = vmatpush2.msra.mxu0 0.0
    %1432 = vmatprep.subr.mxu0 0.0
    %1433 = vmatpush2.msra.mxu0 0.0
    %1434 = vmatprep.subr.mxu0 0.0
    %1435 = vmatpush2.msra.mxu0 0.0
    %1436 = vmatprep.subr.mxu0 0.0
    %1437 = vmatpush2.msra.mxu0 0.0
    %1438 = vmatprep.subr.mxu0 0.0
    %1439 = vmatpush2.msra.mxu0 0.0
    %1440 = vmatprep.subr.mxu0 0.0
    %1441 = vmatpush2.msra.mxu0 0.0
    %1442 = vmatprep.mubr.f32.mxu0 0.0
    %v1443 = vand.u32 %v1361, 4294901760
    %v1444 = vsub.f32 %v1361, %v1443
    %v1445 = vand.u32 %v1444, 4294901760
    %v1446 = vsub.f32 %v1444, %v1445
    %v1447 = vand.u32 %v1446, 4294901760
    %1448 = vmatmul.mubr.f32.gmra.mxu0 %v1447
    %v1449 = vpop.f32.mrf.mxu0
    %v1450 = vadd.f32 0.0, %v1449
    %v1451 = vpop.f32.mrf.mxu0
    %1452 = vdwg.mxu0
    %1453 = vmatprep.subr.mxu0 0.0
    %v1454 = vand.u32 %v1360, 4294901760
    %v1455 = vsub.f32 %v1360, %v1454
    %v1456 = vand.u32 %v1455, 4294901760
    %v1457 = vsub.f32 %v1455, %v1456
    %v1458 = vand.u32 %v1457, 4294901760
    %1459 = vmatpush1.msra.mxu0 %v1458
    %1460 = vmatprep.subr.mxu0 0.0
    %v1461 = vand.u32 %v1359, 4294901760
    %v1462 = vsub.f32 %v1359, %v1461
    %v1463 = vand.u32 %v1462, 4294901760
    %v1464 = vsub.f32 %v1462, %v1463
    %v1465 = vand.u32 %v1464, 4294901760
    %1466 = vmatpush1.msra.mxu0 %v1465
    %1467 = vmatprep.subr.mxu0 0.0
    %v1468 = vand.u32 %v1358, 4294901760
    %v1469 = vsub.f32 %v1358, %v1468
    %v1470 = vand.u32 %v1469, 4294901760
    %v1471 = vsub.f32 %v1469, %v1470
    %v1472 = vand.u32 %v1471, 4294901760
    %1473 = vmatpush1.msra.mxu0 %v1472
    %1474 = vmatprep.subr.mxu0 0.0
    %v1475 = vand.u32 %v1357, 4294901760
    %v1476 = vsub.f32 %v1357, %v1475
    %v1477 = vand.u32 %v1476, 4294901760
    %v1478 = vsub.f32 %v1476, %v1477
    %v1479 = vand.u32 %v1478, 4294901760
    %1480 = vmatpush1.msra.mxu0 %v1479
    %1481 = vmatprep.subr.mxu0 0.0
    %v1482 = vand.u32 %v1356, 4294901760
    %v1483 = vsub.f32 %v1356, %v1482
    %v1484 = vand.u32 %v1483, 4294901760
    %v1485 = vsub.f32 %v1483, %v1484
    %v1486 = vand.u32 %v1485, 4294901760
    %1487 = vmatpush1.msra.mxu0 %v1486
    %1488 = vmatprep.subr.mxu0 0.0
    %v1489 = vand.u32 %v1355, 4294901760
    %v1490 = vsub.f32 %v1355, %v1489
    %v1491 = vand.u32 %v1490, 4294901760
    %v1492 = vsub.f32 %v1490, %v1491
    %v1493 = vand.u32 %v1492, 4294901760
    %1494 = vmatpush1.msra.mxu0 %v1493
    %1495 = vmatprep.subr.mxu0 0.0
    %v1496 = vand.u32 %v1354, 4294901760
    %v1497 = vsub.f32 %v1354, %v1496
    %v1498 = vand.u32 %v1497, 4294901760
    %v1499 = vsub.f32 %v1497, %v1498
    %v1500 = vand.u32 %v1499, 4294901760
    %1501 = vmatpush1.msra.mxu0 %v1500
    %1502 = vmatprep.subr.mxu0 0.0
    %v1503 = vand.u32 %v1353, 4294901760
    %v1504 = vsub.f32 %v1353, %v1503
    %v1505 = vand.u32 %v1504, 4294901760
    %v1506 = vsub.f32 %v1504, %v1505
    %v1507 = vand.u32 %v1506, 4294901760
    %1508 = vmatpush1.msra.mxu0 %v1507
    %1509 = vmatprep.subr.mxu0 0.0
    %v1510 = vand.u32 %v1352, 4294901760
    %v1511 = vsub.f32 %v1352, %v1510
    %v1512 = vand.u32 %v1511, 4294901760
    %v1513 = vsub.f32 %v1511, %v1512
    %v1514 = vand.u32 %v1513, 4294901760
    %1515 = vmatpush1.msra.mxu0 %v1514
    %1516 = vmatprep.subr.mxu0 0.0
    %v1517 = vand.u32 %v1351, 4294901760
    %v1518 = vsub.f32 %v1351, %v1517
    %v1519 = vand.u32 %v1518, 4294901760
    %v1520 = vsub.f32 %v1518, %v1519
    %v1521 = vand.u32 %v1520, 4294901760
    %1522 = vmatpush1.msra.mxu0 %v1521
    %1523 = vmatprep.subr.mxu0 0.0
    %v1524 = vand.u32 %v1350, 4294901760
    %v1525 = vsub.f32 %v1350, %v1524
    %v1526 = vand.u32 %v1525, 4294901760
    %v1527 = vsub.f32 %v1525, %v1526
    %v1528 = vand.u32 %v1527, 4294901760
    %1529 = vmatpush1.msra.mxu0 %v1528
    %1530 = vmatprep.subr.mxu0 0.0
    %v1531 = vand.u32 %v1349, 4294901760
    %v1532 = vsub.f32 %v1349, %v1531
    %v1533 = vand.u32 %v1532, 4294901760
    %v1534 = vsub.f32 %v1532, %v1533
    %v1535 = vand.u32 %v1534, 4294901760
    %1536 = vmatpush1.msra.mxu0 %v1535
    %1537 = vmatprep.subr.mxu0 0.0
    %v1538 = vand.u32 %v1348, 4294901760
    %v1539 = vsub.f32 %v1348, %v1538
    %v1540 = vand.u32 %v1539, 4294901760
    %v1541 = vsub.f32 %v1539, %v1540
    %v1542 = vand.u32 %v1541, 4294901760
    %1543 = vmatpush1.msra.mxu0 %v1542
    %1544 = vmatprep.subr.mxu0 0.0
    %v1545 = vand.u32 %v1347, 4294901760
    %v1546 = vsub.f32 %v1347, %v1545
    %v1547 = vand.u32 %v1546, 4294901760
    %v1548 = vsub.f32 %v1546, %v1547
    %v1549 = vand.u32 %v1548, 4294901760
    %1550 = vmatpush1.msra.mxu0 %v1549
    %1551 = vmatprep.subr.mxu0 0.0
    %v1552 = vand.u32 %v1346, 4294901760
    %v1553 = vsub.f32 %v1346, %v1552
    %v1554 = vand.u32 %v1553, 4294901760
    %v1555 = vsub.f32 %v1553, %v1554
    %v1556 = vand.u32 %v1555, 4294901760
    %1557 = vmatpush1.msra.mxu0 %v1556
    %1558 = vmatprep.subr.mxu0 0.0
    %v1559 = vand.u32 %v1345, 4294901760
    %v1560 = vsub.f32 %v1345, %v1559
    %v1561 = vand.u32 %v1560, 4294901760
    %v1562 = vsub.f32 %v1560, %v1561
    %v1563 = vand.u32 %v1562, 4294901760
    %1564 = vmatpush1.msra.mxu0 %v1563
    %1565 = vmatprep.subr.mxu0 0.0
    %1566 = vmatpush2.msra.mxu0 0.0
    %1567 = vmatprep.subr.mxu0 0.0
    %1568 = vmatpush2.msra.mxu0 0.0
    %1569 = vmatprep.subr.mxu0 0.0
    %1570 = vmatpush2.msra.mxu0 0.0
    %1571 = vmatprep.subr.mxu0 0.0
    %1572 = vmatpush2.msra.mxu0 0.0
    %1573 = vmatprep.subr.mxu0 0.0
    %1574 = vmatpush2.msra.mxu0 0.0
    %1575 = vmatprep.subr.mxu0 0.0
    %1576 = vmatpush2.msra.mxu0 0.0
    %1577 = vmatprep.subr.mxu0 0.0
    %1578 = vmatpush2.msra.mxu0 0.0
    %1579 = vmatprep.subr.mxu0 0.0
    %1580 = vmatpush2.msra.mxu0 0.0
    %1581 = vmatprep.subr.mxu0 0.0
    %1582 = vmatpush2.msra.mxu0 0.0
    %1583 = vmatprep.subr.mxu0 0.0
    %1584 = vmatpush2.msra.mxu0 0.0
    %1585 = vmatprep.subr.mxu0 0.0
    %1586 = vmatpush2.msra.mxu0 0.0
    %1587 = vmatprep.subr.mxu0 0.0
    %1588 = vmatpush2.msra.mxu0 0.0
    %1589 = vmatprep.subr.mxu0 0.0
    %1590 = vmatpush2.msra.mxu0 0.0
    %1591 = vmatprep.subr.mxu0 0.0
    %1592 = vmatpush2.msra.mxu0 0.0
    %1593 = vmatprep.subr.mxu0 0.0
    %1594 = vmatpush2.msra.mxu0 0.0
    %1595 = vmatprep.subr.mxu0 0.0
    %1596 = vmatpush2.msra.mxu0 0.0
    %1597 = vmatprep.mubr.f32.mxu0 0.0
    %v1598 = vand.u32 %v1361, 4294901760
    %1599 = vmatmul.mubr.f32.gmra.mxu0 %v1598
    %v1600 = vpop.f32.mrf.mxu0
    %v1601 = vadd.f32 %v1450, %v1600
    %v1602 = vpop.f32.mrf.mxu0
    %1603 = vdwg.mxu0
    %1604 = vmatprep.subr.mxu0 0.0
    %v1605 = vand.u32 %v1360, 4294901760
    %v1606 = vsub.f32 %v1360, %v1605
    %1607 = vmatpush1.msra.mxu0 %v1606
    %1608 = vmatprep.subr.mxu0 0.0
    %v1609 = vand.u32 %v1359, 4294901760
    %v1610 = vsub.f32 %v1359, %v1609
    %1611 = vmatpush1.msra.mxu0 %v1610
    %1612 = vmatprep.subr.mxu0 0.0
    %v1613 = vand.u32 %v1358, 4294901760
    %v1614 = vsub.f32 %v1358, %v1613
    %1615 = vmatpush1.msra.mxu0 %v1614
    %1616 = vmatprep.subr.mxu0 0.0
    %v1617 = vand.u32 %v1357, 4294901760
    %v1618 = vsub.f32 %v1357, %v1617
    %1619 = vmatpush1.msra.mxu0 %v1618
    %1620 = vmatprep.subr.mxu0 0.0
    %v1621 = vand.u32 %v1356, 4294901760
    %v1622 = vsub.f32 %v1356, %v1621
    %1623 = vmatpush1.msra.mxu0 %v1622
    %1624 = vmatprep.subr.mxu0 0.0
    %v1625 = vand.u32 %v1355, 4294901760
    %v1626 = vsub.f32 %v1355, %v1625
    %1627 = vmatpush1.msra.mxu0 %v1626
    %1628 = vmatprep.subr.mxu0 0.0
    %v1629 = vand.u32 %v1354, 4294901760
    %v1630 = vsub.f32 %v1354, %v1629
    %1631 = vmatpush1.msra.mxu0 %v1630
    %1632 = vmatprep.subr.mxu0 0.0
    %v1633 = vand.u32 %v1353, 4294901760
    %v1634 = vsub.f32 %v1353, %v1633
    %1635 = vmatpush1.msra.mxu0 %v1634
    %1636 = vmatprep.subr.mxu0 0.0
    %v1637 = vand.u32 %v1352, 4294901760
    %v1638 = vsub.f32 %v1352, %v1637
    %1639 = vmatpush1.msra.mxu0 %v1638
    %1640 = vmatprep.subr.mxu0 0.0
    %v1641 = vand.u32 %v1351, 4294901760
    %v1642 = vsub.f32 %v1351, %v1641
    %1643 = vmatpush1.msra.mxu0 %v1642
    %1644 = vmatprep.subr.mxu0 0.0
    %v1645 = vand.u32 %v1350, 4294901760
    %v1646 = vsub.f32 %v1350, %v1645
    %1647 = vmatpush1.msra.mxu0 %v1646
    %1648 = vmatprep.subr.mxu0 0.0
    %v1649 = vand.u32 %v1349, 4294901760
    %v1650 = vsub.f32 %v1349, %v1649
    %1651 = vmatpush1.msra.mxu0 %v1650
    %1652 = vmatprep.subr.mxu0 0.0
    %v1653 = vand.u32 %v1348, 4294901760
    %v1654 = vsub.f32 %v1348, %v1653
    %1655 = vmatpush1.msra.mxu0 %v1654
    %1656 = vmatprep.subr.mxu0 0.0
    %v1657 = vand.u32 %v1347, 4294901760
    %v1658 = vsub.f32 %v1347, %v1657
    %1659 = vmatpush1.msra.mxu0 %v1658
    %1660 = vmatprep.subr.mxu0 0.0
    %v1661 = vand.u32 %v1346, 4294901760
    %v1662 = vsub.f32 %v1346, %v1661
    %1663 = vmatpush1.msra.mxu0 %v1662
    %1664 = vmatprep.subr.mxu0 0.0
    %v1665 = vand.u32 %v1345, 4294901760
    %v1666 = vsub.f32 %v1345, %v1665
    %1667 = vmatpush1.msra.mxu0 %v1666
    %1668 = vmatprep.subr.mxu0 0.0
    %1669 = vmatpush2.msra.mxu0 0.0
    %1670 = vmatprep.subr.mxu0 0.0
    %1671 = vmatpush2.msra.mxu0 0.0
    %1672 = vmatprep.subr.mxu0 0.0
    %1673 = vmatpush2.msra.mxu0 0.0
    %1674 = vmatprep.subr.mxu0 0.0
    %1675 = vmatpush2.msra.mxu0 0.0
    %1676 = vmatprep.subr.mxu0 0.0
    %1677 = vmatpush2.msra.mxu0 0.0
    %1678 = vmatprep.subr.mxu0 0.0
    %1679 = vmatpush2.msra.mxu0 0.0
    %1680 = vmatprep.subr.mxu0 0.0
    %1681 = vmatpush2.msra.mxu0 0.0
    %1682 = vmatprep.subr.mxu0 0.0
    %1683 = vmatpush2.msra.mxu0 0.0
    %1684 = vmatprep.subr.mxu0 0.0
    %1685 = vmatpush2.msra.mxu0 0.0
    %1686 = vmatprep.subr.mxu0 0.0
    %1687 = vmatpush2.msra.mxu0 0.0
    %1688 = vmatprep.subr.mxu0 0.0
    %1689 = vmatpush2.msra.mxu0 0.0
    %1690 = vmatprep.subr.mxu0 0.0
    %1691 = vmatpush2.msra.mxu0 0.0
    %1692 = vmatprep.subr.mxu0 0.0
    %1693 = vmatpush2.msra.mxu0 0.0
    %1694 = vmatprep.subr.mxu0 0.0
    %1695 = vmatpush2.msra.mxu0 0.0
    %1696 = vmatprep.subr.mxu0 0.0
    %1697 = vmatpush2.msra.mxu0 0.0
    %1698 = vmatprep.subr.mxu0 0.0
    %1699 = vmatpush2.msra.mxu0 0.0
    %1700 = vmatprep.mubr.f32.mxu0 0.0
    %v1701 = vand.u32 %v1361, 4294901760
    %v1702 = vsub.f32 %v1361, %v1701
    %1703 = vmatmul.mubr.f32.gmra.mxu0 %v1702
    %v1704 = vpop.f32.mrf.mxu0
    %v1705 = vadd.f32 %v1601, %v1704
    %v1706 = vpop.f32.mrf.mxu0
    %1707 = vdwg.mxu0
    %1708 = vmatprep.subr.mxu0 0.0
    %v1709 = vand.u32 %v1360, 4294901760
    %1710 = vmatpush1.msra.mxu0 %v1709
    %1711 = vmatprep.subr.mxu0 0.0
    %v1712 = vand.u32 %v1359, 4294901760
    %1713 = vmatpush1.msra.mxu0 %v1712
    %1714 = vmatprep.subr.mxu0 0.0
    %v1715 = vand.u32 %v1358, 4294901760
    %1716 = vmatpush1.msra.mxu0 %v1715
    %1717 = vmatprep.subr.mxu0 0.0
    %v1718 = vand.u32 %v1357, 4294901760
    %1719 = vmatpush1.msra.mxu0 %v1718
    %1720 = vmatprep.subr.mxu0 0.0
    %v1721 = vand.u32 %v1356, 4294901760
    %1722 = vmatpush1.msra.mxu0 %v1721
    %1723 = vmatprep.subr.mxu0 0.0
    %v1724 = vand.u32 %v1355, 4294901760
    %1725 = vmatpush1.msra.mxu0 %v1724
    %1726 = vmatprep.subr.mxu0 0.0
    %v1727 = vand.u32 %v1354, 4294901760
    %1728 = vmatpush1.msra.mxu0 %v1727
    %1729 = vmatprep.subr.mxu0 0.0
    %v1730 = vand.u32 %v1353, 4294901760
    %1731 = vmatpush1.msra.mxu0 %v1730
    %1732 = vmatprep.subr.mxu0 0.0
    %v1733 = vand.u32 %v1352, 4294901760
    %1734 = vmatpush1.msra.mxu0 %v1733
    %1735 = vmatprep.subr.mxu0 0.0
    %v1736 = vand.u32 %v1351, 4294901760
    %1737 = vmatpush1.msra.mxu0 %v1736
    %1738 = vmatprep.subr.mxu0 0.0
    %v1739 = vand.u32 %v1350, 4294901760
    %1740 = vmatpush1.msra.mxu0 %v1739
    %1741 = vmatprep.subr.mxu0 0.0
    %v1742 = vand.u32 %v1349, 4294901760
    %1743 = vmatpush1.msra.mxu0 %v1742
    %1744 = vmatprep.subr.mxu0 0.0
    %v1745 = vand.u32 %v1348, 4294901760
    %1746 = vmatpush1.msra.mxu0 %v1745
    %1747 = vmatprep.subr.mxu0 0.0
    %v1748 = vand.u32 %v1347, 4294901760
    %1749 = vmatpush1.msra.mxu0 %v1748
    %1750 = vmatprep.subr.mxu0 0.0
    %v1751 = vand.u32 %v1346, 4294901760
    %1752 = vmatpush1.msra.mxu0 %v1751
    %1753 = vmatprep.subr.mxu0 0.0
    %v1754 = vand.u32 %v1345, 4294901760
    %1755 = vmatpush1.msra.mxu0 %v1754
    %1756 = vmatprep.subr.mxu0 0.0
    %1757 = vmatpush2.msra.mxu0 0.0
    %1758 = vmatprep.subr.mxu0 0.0
    %1759 = vmatpush2.msra.mxu0 0.0
    %1760 = vmatprep.subr.mxu0 0.0
    %1761 = vmatpush2.msra.mxu0 0.0
    %1762 = vmatprep.subr.mxu0 0.0
    %1763 = vmatpush2.msra.mxu0 0.0
    %1764 = vmatprep.subr.mxu0 0.0
    %1765 = vmatpush2.msra.mxu0 0.0
    %1766 = vmatprep.subr.mxu0 0.0
    %1767 = vmatpush2.msra.mxu0 0.0
    %1768 = vmatprep.subr.mxu0 0.0
    %1769 = vmatpush2.msra.mxu0 0.0
    %1770 = vmatprep.subr.mxu0 0.0
    %1771 = vmatpush2.msra.mxu0 0.0
    %1772 = vmatprep.subr.mxu0 0.0
    %1773 = vmatpush2.msra.mxu0 0.0
    %1774 = vmatprep.subr.mxu0 0.0
    %1775 = vmatpush2.msra.mxu0 0.0
    %1776 = vmatprep.subr.mxu0 0.0
    %1777 = vmatpush2.msra.mxu0 0.0
    %1778 = vmatprep.subr.mxu0 0.0
    %1779 = vmatpush2.msra.mxu0 0.0
    %1780 = vmatprep.subr.mxu0 0.0
    %1781 = vmatpush2.msra.mxu0 0.0
    %1782 = vmatprep.subr.mxu0 0.0
    %1783 = vmatpush2.msra.mxu0 0.0
    %1784 = vmatprep.subr.mxu0 0.0
    %1785 = vmatpush2.msra.mxu0 0.0
    %1786 = vmatprep.subr.mxu0 0.0
    %1787 = vmatpush2.msra.mxu0 0.0
    %1788 = vmatprep.mubr.f32.mxu0 0.0
    %v1789 = vand.u32 %v1361, 4294901760
    %v1790 = vsub.f32 %v1361, %v1789
    %v1791 = vand.u32 %v1790, 4294901760
    %1792 = vmatmul.mubr.f32.gmra.mxu0 %v1791
    %v1793 = vpop.f32.mrf.mxu0
    %v1794 = vadd.f32 %v1705, %v1793
    %v1795 = vpop.f32.mrf.mxu0
    %1796 = vdwg.mxu0
    %1797 = vmatprep.subr.mxu0 0.0
    %v1798 = vand.u32 %v1360, 4294901760
    %v1799 = vsub.f32 %v1360, %v1798
    %v1800 = vand.u32 %v1799, 4294901760
    %1801 = vmatpush1.msra.mxu0 %v1800
    %1802 = vmatprep.subr.mxu0 0.0
    %v1803 = vand.u32 %v1359, 4294901760
    %v1804 = vsub.f32 %v1359, %v1803
    %v1805 = vand.u32 %v1804, 4294901760
    %1806 = vmatpush1.msra.mxu0 %v1805
    %1807 = vmatprep.subr.mxu0 0.0
    %v1808 = vand.u32 %v1358, 4294901760
    %v1809 = vsub.f32 %v1358, %v1808
    %v1810 = vand.u32 %v1809, 4294901760
    %1811 = vmatpush1.msra.mxu0 %v1810
    %1812 = vmatprep.subr.mxu0 0.0
    %v1813 = vand.u32 %v1357, 4294901760
    %v1814 = vsub.f32 %v1357, %v1813
    %v1815 = vand.u32 %v1814, 4294901760
    %1816 = vmatpush1.msra.mxu0 %v1815
    %1817 = vmatprep.subr.mxu0 0.0
    %v1818 = vand.u32 %v1356, 4294901760
    %v1819 = vsub.f32 %v1356, %v1818
    %v1820 = vand.u32 %v1819, 4294901760
    %1821 = vmatpush1.msra.mxu0 %v1820
    %1822 = vmatprep.subr.mxu0 0.0
    %v1823 = vand.u32 %v1355, 4294901760
    %v1824 = vsub.f32 %v1355, %v1823
    %v1825 = vand.u32 %v1824, 4294901760
    %1826 = vmatpush1.msra.mxu0 %v1825
    %1827 = vmatprep.subr.mxu0 0.0
    %v1828 = vand.u32 %v1354, 4294901760
    %v1829 = vsub.f32 %v1354, %v1828
    %v1830 = vand.u32 %v1829, 4294901760
    %1831 = vmatpush1.msra.mxu0 %v1830
    %1832 = vmatprep.subr.mxu0 0.0
    %v1833 = vand.u32 %v1353, 4294901760
    %v1834 = vsub.f32 %v1353, %v1833
    %v1835 = vand.u32 %v1834, 4294901760
    %1836 = vmatpush1.msra.mxu0 %v1835
    %1837 = vmatprep.subr.mxu0 0.0
    %v1838 = vand.u32 %v1352, 4294901760
    %v1839 = vsub.f32 %v1352, %v1838
    %v1840 = vand.u32 %v1839, 4294901760
    %1841 = vmatpush1.msra.mxu0 %v1840
    %1842 = vmatprep.subr.mxu0 0.0
    %v1843 = vand.u32 %v1351, 4294901760
    %v1844 = vsub.f32 %v1351, %v1843
    %v1845 = vand.u32 %v1844, 4294901760
    %1846 = vmatpush1.msra.mxu0 %v1845
    %1847 = vmatprep.subr.mxu0 0.0
    %v1848 = vand.u32 %v1350, 4294901760
    %v1849 = vsub.f32 %v1350, %v1848
    %v1850 = vand.u32 %v1849, 4294901760
    %1851 = vmatpush1.msra.mxu0 %v1850
    %1852 = vmatprep.subr.mxu0 0.0
    %v1853 = vand.u32 %v1349, 4294901760
    %v1854 = vsub.f32 %v1349, %v1853
    %v1855 = vand.u32 %v1854, 4294901760
    %1856 = vmatpush1.msra.mxu0 %v1855
    %1857 = vmatprep.subr.mxu0 0.0
    %v1858 = vand.u32 %v1348, 4294901760
    %v1859 = vsub.f32 %v1348, %v1858
    %v1860 = vand.u32 %v1859, 4294901760
    %1861 = vmatpush1.msra.mxu0 %v1860
    %1862 = vmatprep.subr.mxu0 0.0
    %v1863 = vand.u32 %v1347, 4294901760
    %v1864 = vsub.f32 %v1347, %v1863
    %v1865 = vand.u32 %v1864, 4294901760
    %1866 = vmatpush1.msra.mxu0 %v1865
    %1867 = vmatprep.subr.mxu0 0.0
    %v1868 = vand.u32 %v1346, 4294901760
    %v1869 = vsub.f32 %v1346, %v1868
    %v1870 = vand.u32 %v1869, 4294901760
    %1871 = vmatpush1.msra.mxu0 %v1870
    %1872 = vmatprep.subr.mxu0 0.0
    %v1873 = vand.u32 %v1345, 4294901760
    %v1874 = vsub.f32 %v1345, %v1873
    %v1875 = vand.u32 %v1874, 4294901760
    %1876 = vmatpush1.msra.mxu0 %v1875
    %1877 = vmatprep.subr.mxu0 0.0
    %1878 = vmatpush2.msra.mxu0 0.0
    %1879 = vmatprep.subr.mxu0 0.0
    %1880 = vmatpush2.msra.mxu0 0.0
    %1881 = vmatprep.subr.mxu0 0.0
    %1882 = vmatpush2.msra.mxu0 0.0
    %1883 = vmatprep.subr.mxu0 0.0
    %1884 = vmatpush2.msra.mxu0 0.0
    %1885 = vmatprep.subr.mxu0 0.0
    %1886 = vmatpush2.msra.mxu0 0.0
    %1887 = vmatprep.subr.mxu0 0.0
    %1888 = vmatpush2.msra.mxu0 0.0
    %1889 = vmatprep.subr.mxu0 0.0
    %1890 = vmatpush2.msra.mxu0 0.0
    %1891 = vmatprep.subr.mxu0 0.0
    %1892 = vmatpush2.msra.mxu0 0.0
    %1893 = vmatprep.subr.mxu0 0.0
    %1894 = vmatpush2.msra.mxu0 0.0
    %1895 = vmatprep.subr.mxu0 0.0
    %1896 = vmatpush2.msra.mxu0 0.0
    %1897 = vmatprep.subr.mxu0 0.0
    %1898 = vmatpush2.msra.mxu0 0.0
    %1899 = vmatprep.subr.mxu0 0.0
    %1900 = vmatpush2.msra.mxu0 0.0
    %1901 = vmatprep.subr.mxu0 0.0
    %1902 = vmatpush2.msra.mxu0 0.0
    %1903 = vmatprep.subr.mxu0 0.0
    %1904 = vmatpush2.msra.mxu0 0.0
    %1905 = vmatprep.subr.mxu0 0.0
    %1906 = vmatpush2.msra.mxu0 0.0
    %1907 = vmatprep.subr.mxu0 0.0
    %1908 = vmatpush2.msra.mxu0 0.0
    %1909 = vmatprep.mubr.f32.mxu0 0.0
    %v1910 = vand.u32 %v1361, 4294901760
    %1911 = vmatmul.mubr.f32.gmra.mxu0 %v1910
    %v1912 = vpop.f32.mrf.mxu0
    %v1913 = vadd.f32 %v1794, %v1912
    %v1914 = vpop.f32.mrf.mxu0
    %1915 = vdwg.mxu0
    %1916 = vmatprep.subr.mxu0 0.0
    %v1917 = vand.u32 %v1360, 4294901760
    %1918 = vmatpush1.msra.mxu0 %v1917
    %1919 = vmatprep.subr.mxu0 0.0
    %v1920 = vand.u32 %v1359, 4294901760
    %1921 = vmatpush1.msra.mxu0 %v1920
    %1922 = vmatprep.subr.mxu0 0.0
    %v1923 = vand.u32 %v1358, 4294901760
    %1924 = vmatpush1.msra.mxu0 %v1923
    %1925 = vmatprep.subr.mxu0 0.0
    %v1926 = vand.u32 %v1357, 4294901760
    %1927 = vmatpush1.msra.mxu0 %v1926
    %1928 = vmatprep.subr.mxu0 0.0
    %v1929 = vand.u32 %v1356, 4294901760
    %1930 = vmatpush1.msra.mxu0 %v1929
    %1931 = vmatprep.subr.mxu0 0.0
    %v1932 = vand.u32 %v1355, 4294901760
    %1933 = vmatpush1.msra.mxu0 %v1932
    %1934 = vmatprep.subr.mxu0 0.0
    %v1935 = vand.u32 %v1354, 4294901760
    %1936 = vmatpush1.msra.mxu0 %v1935
    %1937 = vmatprep.subr.mxu0 0.0
    %v1938 = vand.u32 %v1353, 4294901760
    %1939 = vmatpush1.msra.mxu0 %v1938
    %1940 = vmatprep.subr.mxu0 0.0
    %v1941 = vand.u32 %v1352, 4294901760
    %1942 = vmatpush1.msra.mxu0 %v1941
    %1943 = vmatprep.subr.mxu0 0.0
    %v1944 = vand.u32 %v1351, 4294901760
    %1945 = vmatpush1.msra.mxu0 %v1944
    %1946 = vmatprep.subr.mxu0 0.0
    %v1947 = vand.u32 %v1350, 4294901760
    %1948 = vmatpush1.msra.mxu0 %v1947
    %1949 = vmatprep.subr.mxu0 0.0
    %v1950 = vand.u32 %v1349, 4294901760
    %1951 = vmatpush1.msra.mxu0 %v1950
    %1952 = vmatprep.subr.mxu0 0.0
    %v1953 = vand.u32 %v1348, 4294901760
    %1954 = vmatpush1.msra.mxu0 %v1953
    %1955 = vmatprep.subr.mxu0 0.0
    %v1956 = vand.u32 %v1347, 4294901760
    %1957 = vmatpush1.msra.mxu0 %v1956
    %1958 = vmatprep.subr.mxu0 0.0
    %v1959 = vand.u32 %v1346, 4294901760
    %1960 = vmatpush1.msra.mxu0 %v1959
    %1961 = vmatprep.subr.mxu0 0.0
    %v1962 = vand.u32 %v1345, 4294901760
    %1963 = vmatpush1.msra.mxu0 %v1962
    %1964 = vmatprep.subr.mxu0 0.0
    %1965 = vmatpush2.msra.mxu0 0.0
    %1966 = vmatprep.subr.mxu0 0.0
    %1967 = vmatpush2.msra.mxu0 0.0
    %1968 = vmatprep.subr.mxu0 0.0
    %1969 = vmatpush2.msra.mxu0 0.0
    %1970 = vmatprep.subr.mxu0 0.0
    %1971 = vmatpush2.msra.mxu0 0.0
    %1972 = vmatprep.subr.mxu0 0.0
    %1973 = vmatpush2.msra.mxu0 0.0
    %1974 = vmatprep.subr.mxu0 0.0
    %1975 = vmatpush2.msra.mxu0 0.0
    %1976 = vmatprep.subr.mxu0 0.0
    %1977 = vmatpush2.msra.mxu0 0.0
    %1978 = vmatprep.subr.mxu0 0.0
    %1979 = vmatpush2.msra.mxu0 0.0
    %1980 = vmatprep.subr.mxu0 0.0
    %1981 = vmatpush2.msra.mxu0 0.0
    %1982 = vmatprep.subr.mxu0 0.0
    %1983 = vmatpush2.msra.mxu0 0.0
    %1984 = vmatprep.subr.mxu0 0.0
    %1985 = vmatpush2.msra.mxu0 0.0
    %1986 = vmatprep.subr.mxu0 0.0
    %1987 = vmatpush2.msra.mxu0 0.0
    %1988 = vmatprep.subr.mxu0 0.0
    %1989 = vmatpush2.msra.mxu0 0.0
    %1990 = vmatprep.subr.mxu0 0.0
    %1991 = vmatpush2.msra.mxu0 0.0
    %1992 = vmatprep.subr.mxu0 0.0
    %1993 = vmatpush2.msra.mxu0 0.0
    %1994 = vmatprep.subr.mxu0 0.0
    %1995 = vmatpush2.msra.mxu0 0.0
    %1996 = vmatprep.mubr.f32.mxu0 0.0
    %v1997 = vand.u32 %v1361, 4294901760
    %1998 = vmatmul.mubr.f32.gmra.mxu0 %v1997
    %v1999 = vpop.f32.mrf.mxu0
    %v2000 = vadd.f32 %v1913, %v1999
    %v2001 = vpop.f32.mrf.mxu0
    %2002 = vdwg.mxu0
    %s2003 = sld [smem:[#allocation2]]
    %v2004 = vstv %s2003
    %v2005 = vadd.f32 %v2000, %v2004
    %s2006 = sld [smem:[#allocation2 + $0x1]]
    %v2007 = vstv %s2006
    %v2008 = vadd.f32 %v2000, %v2007
    %v2010 = vrot.slane %v1230, 7
    %v2012 = vsub.f32 %v1230, %v2010
    %v2014 = vrot.slane %v2005, 7
    %v2016 = vsub.f32 %v2012, %v2014
    %v2017 = vmul.f32 %v2008, 10.0
    %v2018 = vrcp.pop %v2017
    %v2019 = vmul.f32 %v2016, %v2018
    %v2020 = vmul.f32 %v2019, 2.3025851
    %v2021 = vmul.f32 %v2020, 1.442695
    %v2022 = vpow.pop %v2021
    %2023 = vst [vmem:[#allocation5 - $0x1] sm:$0x2] %v2022
    // Predicated region
    $region26: #{tpu_custom_call.1} parent=1 // pred_check
      _
    $region27: #{tpu_custom_call.1} parent=1 // pred_check_branch
      %2025 = sbr.rel (0) target = $region29
    $region28: #{tpu_custom_call.1} parent=1 // pred_region
      %s2027 = ssub.s32 16, 16
      %2028 = vsyncadd [#allocation3], %s2027
      %s2030 = sshll.u32 [#allocation5], 4
      %s2031 = int_to_ptr.vmem [resolvable:$true] %s2030
      %2033 = dma.vmem_to_hbm [thread:$0]  %s2031, 16, %s5, [#allocation3]
    $region29: #{tpu_custom_call.1} parent=1 // pred_fallthru
      _
    // Predicated region
    $region30: #{tpu_custom_call.1} parent=1 // pred_check
      _
    $region31: #{tpu_custom_call.1} parent=1 // pred_check_branch
      %2035 = sbr.rel (0) target = $region33
    $region32: #{tpu_custom_call.1} parent=1 // pred_region
      %2036 = dma.done [#allocation3], 16
    $region33: #{tpu_custom_call.1} parent=1 // pred_fallthru
      _
    %2037 = vsyncpa [#allocation3], 1
    %2038 = vsyncpa [#allocation4], 1

</llo_original>
